<compile_context>
chip_gen: v7x
topology: tpu7x:2x2x1
jax: 0.10.0
libtpu: 0.0.40
codegen_flags: <defaults>
</compile_context>

<pallas_src>
import functools

import jax
import jax.numpy as jnp
from jax.experimental import pallas as pl
from jax.experimental.pallas import tpu as pltpu

HIDDEN_SIZE = 256
# Humanoid-v4 dims (observation 376, action 17)
STATE_DIM = 376
ACTION_DIM = 17


def _round_up(x, m):
    return ((x + m - 1) // m) * m


def _critic_kernel(s_ref, a_ref, w1s_ref, w1a_ref, b1_ref,
                   w2_ref, b2_ref, w3_ref, b3_ref, o_ref):
    cdt = w1s_ref.dtype  # MXU compute dtype (bf16 or f32); accumulation is always f32.

    # Layer 1, split matmul == Linear(S+A, H) applied to concat([state, action]):
    #   (block_b, S) @ (S, H)   +   (block_b, A) @ (A, H)
    h1 = jnp.dot(s_ref[...].astype(cdt), w1s_ref[...],
                 preferred_element_type=jnp.float32)
    h1 = h1 + jnp.dot(a_ref[...], w1a_ref[...],
                      preferred_element_type=jnp.float32)   # tiny K=17 pass, kept f32
    h1 = jnp.maximum(h1 + b1_ref[...], 0.0)

    # Layer 2: (block_b, H) @ (H, H)
    h2 = jnp.dot(h1.astype(cdt), w2_ref[...], preferred_element_type=jnp.float32)
    h2 = jnp.maximum(h2 + b2_ref[...], 0.0)

    # Q head (N=1): VPU multiply + XLU lane reduction, stored as a lane-dense row
    # instead of an N=1 MXU pass with masked (block_b, 1) stores.
    q = jnp.sum(h2 * w3_ref[...], axis=-1) + b3_ref[0]      # (block_b,)
    o_ref[...] = q[None, :].astype(o_ref.dtype)             # (1, block_b)


def init_params(key, state_dim, action_dim, hidden):
    """Deterministic init mimicking nn.Linear: U(-1/sqrt(fan_in), 1/sqrt(fan_in))."""
    def linear(k, fan_in, fan_out):
        kw, kb = jax.random.split(k)
        bound = 1.0 / jnp.sqrt(fan_in)
        w = jax.random.uniform(kw, (fan_in, fan_out), jnp.float32, -bound, bound)
        b = jax.random.uniform(kb, (fan_out,), jnp.float32, -bound, bound)
        return w, b

    k1, k2, k3 = jax.random.split(key, 3)
    w1, b1 = linear(k1, state_dim + action_dim, hidden)
    w2, b2 = linear(k2, hidden, hidden)
    w3, b3 = linear(k3, hidden, 1)
    # Weights stored as (in_features, out_features) (transposed vs. PyTorch's (out, in)).
    return (w1, b1, w2, b2, w3, b3)


def pack_params(params, state_dim=STATE_DIM, compute_dtype=jnp.bfloat16):
    """One-time packing: split W1 into state/action parts, make W3 a row, cast dtypes."""
    w1, b1, w2, b2, w3, b3 = params
    H = w2.shape[0]
    return (
        w1[:state_dim, :].astype(compute_dtype),   # (S, H)  compute dtype
        w1[state_dim:, :].astype(jnp.float32),     # (A, H)  f32 (tiny, ragged K)
        b1.reshape(1, H).astype(jnp.float32),      # (1, H)  f32
        w2.astype(compute_dtype),                  # (H, H)  compute dtype
        b2.reshape(1, H).astype(jnp.float32),      # (1, H)  f32
        w3.reshape(1, H).astype(jnp.float32),      # (1, H)  f32 (W3 as a row)
        b3.reshape(1).astype(jnp.float32),         # (1,)    f32 scalar -> SMEM
    )


@functools.partial(jax.jit, static_argnames=("block_b",))
def critic_forward(state, action, packed, *, block_b=512):
    w1s, w1a, b1, w2, b2, w3, b3 = packed
    B, S = state.shape
    A = action.shape[1]
    H = w2.shape[0]

    # Batch tiling: multiple of 128 (lane-dense output rows); pad batch only if needed.
    block_b = max(128, _round_up(block_b, 128))
    block_b = min(block_b, _round_up(B, 128))
    B_pad = _round_up(B, block_b)
    grid = (B_pad // block_b,)

    if B_pad != B:
        # Zero rows are exact no-ops through the MLP and are sliced off at the end.
        state = jnp.pad(state, ((0, B_pad - B), (0, 0)))
        action = jnp.pad(action, ((0, B_pad - B), (0, 0)))

    w_item = jnp.dtype(w1s.dtype).itemsize
    x_item = jnp.dtype(state.dtype).itemsize
    cost = pl.CostEstimate(
        flops=2 * B_pad * (S * H + A * H + H * H + H),
        transcendentals=0,
        bytes_accessed=(B_pad * (S + A) * x_item            # activations in (f32)
                        + (S * H + H * H) * w_item          # big weights
                        + (A * H + H) * 4                   # small f32 weights
                        + (2 * H + 1) * 4                   # biases
                        + B_pad * 4),                       # q out
    )

    out = pl.pallas_call(
        _critic_kernel,
        out_shape=jax.ShapeDtypeStruct((1, B_pad), jnp.float32),
        grid_spec=pltpu.PrefetchScalarGridSpec(
            num_scalar_prefetch=0,
            grid=grid,
            in_specs=[
                pl.BlockSpec((block_b, S), lambda i: (i, 0)),       # state tile
                pl.BlockSpec((block_b, A), lambda i: (i, 0)),       # action tile
                pl.BlockSpec((S, H), lambda i: (0, 0)),             # W1_state
                pl.BlockSpec((A, H), lambda i: (0, 0)),             # W1_action
                pl.BlockSpec((1, H), lambda i: (0, 0)),             # b1
                pl.BlockSpec((H, H), lambda i: (0, 0)),             # W2
                pl.BlockSpec((1, H), lambda i: (0, 0)),             # b2
                pl.BlockSpec((1, H), lambda i: (0, 0)),             # W3 row
                pl.BlockSpec(memory_space=pltpu.MemorySpace.SMEM),  # b3 scalar
            ],
            out_specs=pl.BlockSpec((1, block_b), lambda i: (0, i)),  # lane-dense q row
        ),
        compiler_params=pltpu.CompilerParams(
            dimension_semantics=("parallel",),
            vmem_limit_bytes=32 * 1024 * 1024,
        ),
        cost_estimate=cost,
    )(state, action, w1s, w1a, b1, w2, b2, w3, b3)

    return out[0, :B].reshape(B, 1)


def critic_ref(state, action, params):
    """Pure-JAX reference (matches the PyTorch module exactly, f32)."""
    w1, b1, w2, b2, w3, b3 = params
    x = jnp.concatenate([state, action], axis=1)
    h1 = jnp.maximum(x @ w1 + b1, 0.0)
    h2 = jnp.maximum(h1 @ w2 + b2, 0.0)
    return h2 @ w3 + b3


if __name__ == "__main__":
    key = jax.random.PRNGKey(0)
    kp, ks, ka = jax.random.split(key, 3)

    B = 256  # small test batch; block_b=128 -> 2 grid steps (keeps both v7x TCs busy)
    params = init_params(kp, STATE_DIM, ACTION_DIM, HIDDEN_SIZE)
    state = jax.random.normal(ks, (B, STATE_DIM), jnp.float32)
    action = jax.random.normal(ka, (B, ACTION_DIM), jnp.float32)

    q_ref = critic_ref(state, action, params)

    # f32 path: tight check against the reference.
    packed_f32 = pack_params(params, compute_dtype=jnp.float32)
    q32 = jax.block_until_ready(critic_forward(state, action, packed_f32, block_b=128))
    assert q32.shape == (B, 1), q32.shape
    assert jnp.allclose(q32, q_ref, atol=1e-3, rtol=1e-3), \
        f"f32 mismatch: max abs err {jnp.max(jnp.abs(q32 - q_ref))}"

    # bf16 fast path (native MXU dtype on v6e/v7x): loose tolerance.
    packed_bf16 = pack_params(params, compute_dtype=jnp.bfloat16)
    qbf = jax.block_until_ready(critic_forward(state, action, packed_bf16, block_b=128))
    assert qbf.shape == (B, 1), qbf.shape
    assert jnp.allclose(qbf, q_ref, atol=5e-2, rtol=5e-2), \
        f"bf16 mismatch: max abs err {jnp.max(jnp.abs(qbf - q_ref))}"

    print("KERNEL_OK")
</pallas_src>

<mosaic_0001>
module attributes {stable_mosaic.version = 11 : i64} {
  func.func @_critic_kernel(%arg0: i32, %arg1: memref<128x376xf32, #tpu.memory_space<vmem>>, %arg2: memref<128x17xf32, #tpu.memory_space<vmem>>, %arg3: memref<376x256xf32, #tpu.memory_space<vmem>>, %arg4: memref<17x256xf32, #tpu.memory_space<vmem>>, %arg5: memref<1x256xf32, #tpu.memory_space<vmem>>, %arg6: memref<256x256xf32, #tpu.memory_space<vmem>>, %arg7: memref<1x256xf32, #tpu.memory_space<vmem>>, %arg8: memref<1x256xf32, #tpu.memory_space<vmem>>, %arg9: memref<1xf32, #tpu.memory_space<smem>>, %arg10: memref<1x128xf32, #tpu.memory_space<vmem>>) attributes {dimension_semantics = [#tpu.dimension_semantics<parallel>], iteration_bounds = array<i64: 2>, scalar_prefetch = 0 : i64, scratch_operands = 0 : i64, tpu.core_type = #tpu.core_type<tc>, window_params = [{transform_indices = @transform_0, window_bounds = array<i64: 128, 376>}, {transform_indices = @transform_1, window_bounds = array<i64: 128, 17>}, {pipeline_mode = #tpu.pipeline_mode<synchronous>, transform_indices = @transform_2, window_bounds = array<i64: 376, 256>}, {pipeline_mode = #tpu.pipeline_mode<synchronous>, transform_indices = @transform_3, window_bounds = array<i64: 17, 256>}, {pipeline_mode = #tpu.pipeline_mode<synchronous>, transform_indices = @transform_4, window_bounds = array<i64: 1, 256>}, {pipeline_mode = #tpu.pipeline_mode<synchronous>, transform_indices = @transform_5, window_bounds = array<i64: 256, 256>}, {pipeline_mode = #tpu.pipeline_mode<synchronous>, transform_indices = @transform_6, window_bounds = array<i64: 1, 256>}, {pipeline_mode = #tpu.pipeline_mode<synchronous>, transform_indices = @transform_7, window_bounds = array<i64: 1, 256>}, {transform_indices = @transform_8, window_bounds = array<i64: 1>}, {transform_indices = @transform_9, window_bounds = array<i64: 1, 128>}]} {
    %c0 = arith.constant 0 : index
    %c0_0 = arith.constant 0 : index
    %0 = vector.load %arg1[%c0, %c0_0] : memref<128x376xf32, #tpu.memory_space<vmem>>, vector<128x376xf32>
    %c0_1 = arith.constant 0 : index
    %c0_2 = arith.constant 0 : index
    %1 = vector.load %arg3[%c0_1, %c0_2] : memref<376x256xf32, #tpu.memory_space<vmem>>, vector<376x256xf32>
    %cst = arith.constant dense<0.000000e+00> : vector<128x256xf32>
    %2 = tpu.matmul %0, %1, %cst {dimension_numbers = #tpu.dot_dimension_numbers<[1], [0], [0], [1], [0, 0, 1, 1], [], []>} : vector<128x376xf32>, vector<376x256xf32>, vector<128x256xf32> -> vector<128x256xf32>
    %c0_3 = arith.constant 0 : index
    %c0_4 = arith.constant 0 : index
    %3 = vector.load %arg2[%c0_3, %c0_4] : memref<128x17xf32, #tpu.memory_space<vmem>>, vector<128x17xf32>
    %c0_5 = arith.constant 0 : index
    %c0_6 = arith.constant 0 : index
    %4 = vector.load %arg4[%c0_5, %c0_6] : memref<17x256xf32, #tpu.memory_space<vmem>>, vector<17x256xf32>
    %cst_7 = arith.constant dense<0.000000e+00> : vector<128x256xf32>
    %5 = tpu.matmul %3, %4, %cst_7 {dimension_numbers = #tpu.dot_dimension_numbers<[1], [0], [0], [1], [0, 0, 1, 1], [], []>} : vector<128x17xf32>, vector<17x256xf32>, vector<128x256xf32> -> vector<128x256xf32>
    %6 = arith.addf %2, %5 : vector<128x256xf32>
    %c0_8 = arith.constant 0 : index
    %c0_9 = arith.constant 0 : index
    %7 = vector.load %arg5[%c0_8, %c0_9] : memref<1x256xf32, #tpu.memory_space<vmem>>, vector<1x256xf32>
    %8 = vector.broadcast %7 : vector<1x256xf32> to vector<128x256xf32>
    %9 = arith.addf %6, %8 : vector<128x256xf32>
    %cst_10 = arith.constant 0.000000e+00 : f32
    %10 = vector.broadcast %cst_10 : f32 to vector<128x256xf32>
    %11 = arith.maximumf %9, %10 : vector<128x256xf32>
    %c0_11 = arith.constant 0 : index
    %c0_12 = arith.constant 0 : index
    %12 = vector.load %arg6[%c0_11, %c0_12] : memref<256x256xf32, #tpu.memory_space<vmem>>, vector<256x256xf32>
    %cst_13 = arith.constant dense<0.000000e+00> : vector<128x256xf32>
    %13 = tpu.matmul %11, %12, %cst_13 {dimension_numbers = #tpu.dot_dimension_numbers<[1], [0], [0], [1], [0, 0, 1, 1], [], []>} : vector<128x256xf32>, vector<256x256xf32>, vector<128x256xf32> -> vector<128x256xf32>
    %c0_14 = arith.constant 0 : index
    %c0_15 = arith.constant 0 : index
    %14 = vector.load %arg7[%c0_14, %c0_15] : memref<1x256xf32, #tpu.memory_space<vmem>>, vector<1x256xf32>
    %15 = vector.broadcast %14 : vector<1x256xf32> to vector<128x256xf32>
    %16 = arith.addf %13, %15 : vector<128x256xf32>
    %cst_16 = arith.constant 0.000000e+00 : f32
    %17 = vector.broadcast %cst_16 : f32 to vector<128x256xf32>
    %18 = arith.maximumf %16, %17 : vector<128x256xf32>
    %c0_17 = arith.constant 0 : index
    %c0_18 = arith.constant 0 : index
    %19 = vector.load %arg8[%c0_17, %c0_18] : memref<1x256xf32, #tpu.memory_space<vmem>>, vector<1x256xf32>
    %20 = vector.broadcast %19 : vector<1x256xf32> to vector<128x256xf32>
    %21 = arith.mulf %18, %20 : vector<128x256xf32>
    %cst_19 = arith.constant dense<0.000000e+00> : vector<128xf32>
    %22 = vector.multi_reduction <add>, %21, %cst_19 [1] : vector<128x256xf32> to vector<128xf32>
    %c0_20 = arith.constant 0 : index
    %23 = memref.load %arg9[%c0_20] : memref<1xf32, #tpu.memory_space<smem>>
    %24 = vector.broadcast %23 : f32 to vector<128xf32>
    %25 = arith.addf %22, %24 : vector<128xf32>
    %26 = vector.shape_cast %25 : vector<128xf32> to vector<1x128xf32>
    %c0_21 = arith.constant 0 : index
    %c0_22 = arith.constant 0 : index
    %27 = vector.load %arg10[%c0_21, %c0_22] : memref<1x128xf32, #tpu.memory_space<vmem>>, vector<1x128xf32>
    tpu.vector_store %arg10[%c0_21, %c0_22], %26 {strides = array<i32>} : memref<1x128xf32, #tpu.memory_space<vmem>>, vector<1x128xf32>,
    return
  }
  func.func @transform_0(%arg0: i32) -> (i32, i32) {
    %c0_i32 = arith.constant 0 : i32
    %c0_i32_0 = arith.constant 0 : i32
    return %arg0, %c0_i32 : i32, i32
  }
  func.func @transform_1(%arg0: i32) -> (i32, i32) {
    %c0_i32 = arith.constant 0 : i32
    %c0_i32_0 = arith.constant 0 : i32
    return %arg0, %c0_i32 : i32, i32
  }
  func.func @transform_2(%arg0: i32) -> (i32, i32) {
    %c0_i32 = arith.constant 0 : i32
    %c0_i32_0 = arith.constant 0 : i32
    %c0_i32_1 = arith.constant 0 : i32
    return %c0_i32, %c0_i32_0 : i32, i32
  }
  func.func @transform_3(%arg0: i32) -> (i32, i32) {
    %c0_i32 = arith.constant 0 : i32
    %c0_i32_0 = arith.constant 0 : i32
    %c0_i32_1 = arith.constant 0 : i32
    return %c0_i32, %c0_i32_0 : i32, i32
  }
  func.func @transform_4(%arg0: i32) -> (i32, i32) {
    %c0_i32 = arith.constant 0 : i32
    %c0_i32_0 = arith.constant 0 : i32
    %c0_i32_1 = arith.constant 0 : i32
    return %c0_i32, %c0_i32_0 : i32, i32
  }
  func.func @transform_5(%arg0: i32) -> (i32, i32) {
    %c0_i32 = arith.constant 0 : i32
    %c0_i32_0 = arith.constant 0 : i32
    %c0_i32_1 = arith.constant 0 : i32
    return %c0_i32, %c0_i32_0 : i32, i32
  }
  func.func @transform_6(%arg0: i32) -> (i32, i32) {
    %c0_i32 = arith.constant 0 : i32
    %c0_i32_0 = arith.constant 0 : i32
    %c0_i32_1 = arith.constant 0 : i32
    return %c0_i32, %c0_i32_0 : i32, i32
  }
  func.func @transform_7(%arg0: i32) -> (i32, i32) {
    %c0_i32 = arith.constant 0 : i32
    %c0_i32_0 = arith.constant 0 : i32
    %c0_i32_1 = arith.constant 0 : i32
    return %c0_i32, %c0_i32_0 : i32, i32
  }
  func.func @transform_8(%arg0: i32) -> i32 {
    %c0_i32 = arith.constant 0 : i32
    %c0_i32_0 = arith.constant 0 : i32
    return %c0_i32 : i32
  }
  func.func @transform_9(%arg0: i32) -> (i32, i32) {
    %c0_i32 = arith.constant 0 : i32
    %c0_i32_0 = arith.constant 0 : i32
    return %c0_i32, %arg0 : i32, i32
  }
}

</mosaic_0001>

<llo_original>
// kernel: critic_forward.1
$region0: #{critic_forward.1}
  #allocation0 [shape = 'u32[]', space=smem, size = 0x4, offset = 0x4, fixed_abs, tag = 'smem constant byte address 0x4 - core index']
  #allocation1 [shape = 'u32[144,128]{1,0:T(1,128)}', space=vmem, size = 0x12000, scoped, tag = 'internal scratch']
  #allocation2 [shape = 'f32[1]{0:T(128)S(6)}', space=smem, size = 0x200, scoped, tag = 'scoped memory for critic_forward.1']
  %s0 = inlined_call_operand.vmem [shape: f32[256,376], index: 0, kind: input, shape index: {}]
  %s1 = inlined_call_operand.vmem [shape: f32[256,17], index: 1, kind: input, shape index: {}]
  %s2 = inlined_call_operand.vmem [shape: f32[376,256], index: 2, kind: input, shape index: {}]
  %s3 = inlined_call_operand.vmem [shape: f32[17,256], index: 3, kind: input, shape index: {}]
  %s4 = inlined_call_operand.vmem [shape: f32[1,256], index: 4, kind: input, shape index: {}]
  %s5 = inlined_call_operand.vmem [shape: f32[256,256], index: 5, kind: input, shape index: {}]
  %s6 = inlined_call_operand.vmem [shape: f32[1,256], index: 6, kind: input, shape index: {}]
  %s7 = inlined_call_operand.vmem [shape: f32[1,256], index: 7, kind: input, shape index: {}]
  %s8 = inlined_call_operand.<no memory space> [shape: f32[1], index: 8, kind: input, shape index: {}]
  %s9 = inlined_call_operand.hbm [shape: f32[1,256], index: 9, kind: output, shape index: {}]
  %s10 = sld [smem:[#allocation0]]
  $region69: #{critic_forward.1} parent=0
    _
  %s12 = ssub.s32 1, %s10
  %s13 = scalar_select 0, %s12, %s10
  %14 = sst [smem:[#allocation2]] %s8
  $region1: #{critic_forward.1} parent=0
    #allocation3 [shape = 'u8[1024]{0}', space=vmem, size = 0x400, scoped, tag = 'output window, operand 0']
    #allocation4 [shape = 's32[2]{0}', space=sflag, size = 0x8, scoped, tag = 'scoped memory for critic_forward.1']
    %15 = vsyncpa [#allocation4], 0
    %s16 = scalar_lea.sflag [#allocation4], 1
    %17 = vsyncpa %s16, 0
    loop: start=0, step=1, limit=4
    $region2: #{critic_forward.1} parent=1 // loop_pre_header
      _
    $region3: #{critic_forward.1} parent=1 // loop_header
      %s19 = sphi 0, %s23
      %p20 = scmp.ge.s32.totalorder %s19, 4
      %s29 = sphi 0, %s31
      %s32 = sphi 0, %s29
      %s33 = sphi 0, %s32
      %s49 = sphi 0, %s33
      %s55 = sphi 0, %s57
      %s58 = sphi 0, %s55
      %s59 = sphi 0, %s58
      %s75 = sphi 0, %s59
      %s79 = sphi 0, %s79
      %s81 = sphi 0, %s79
      %s82 = sphi 0, %s81
      %s96 = sphi 0, %s82
      %s100 = sphi 0, %s100
      %s102 = sphi 0, %s100
      %s103 = sphi 0, %s102
      %s117 = sphi 0, %s103
      %s121 = sphi 0, %s121
      %s123 = sphi 0, %s121
      %s124 = sphi 0, %s123
      %s138 = sphi 0, %s124
      %s142 = sphi 0, %s142
      %s144 = sphi 0, %s142
      %s145 = sphi 0, %s144
      %s159 = sphi 0, %s145
      %s163 = sphi 0, %s163
      %s165 = sphi 0, %s163
      %s166 = sphi 0, %s165
      %s180 = sphi 0, %s166
      %s184 = sphi 0, %s184
      %s186 = sphi 0, %s184
      %s187 = sphi 0, %s186
      %s201 = sphi 0, %s187
      %s205 = sphi 0, %s205
      %s207 = sphi 0, %s205
      %s208 = sphi 0, %s207
      %s222 = sphi 0, %s208
      %s228 = sphi 0, %s230
      %s231 = sphi 0, %s228
      %s232 = sphi 0, %s231
      %s248 = sphi 0, %s232
    $region4: #{critic_forward.1} parent=1 // loop_header_branch
      %22 = sbr.rel (%p20) target = $region8
    $region5: #{critic_forward.1} parent=1 // loop_body
      %s24 = ssub.s32 %s19, 1
      %s25 = ssub.s32 %s19, 2
      %s26 = sadd.s32 %s19, 1
      %s27 = ssub.s32 %s19, %s26
      %p28 = scmp.eq.s32.totalorder %s27, 0
      %s30 = sadd.s32 %s29, 1
      %s31 = scalar_select %p28, %s29, %s30
      %p34 = pneg %p28
      %p35 = scmp.eq.s32.totalorder %s19, 1
      %p36 = por %p34, %p35
      %p37 = scmp.ne.s32.totalorder %s29, %s32
      %p38 = scmp.eq.s32.totalorder %s19, 0
      %p39 = por %p37, %p38
      %p40 = scmp.ne.s32.totalorder %s29, %s32
      %p41 = scmp.eq.s32.totalorder %s24, 1
      %p42 = por %p40, %p41
      %p43 = scmp.ne.s32.totalorder %s32, %s33
      %p44 = scmp.eq.s32.totalorder %s24, 0
      %p45 = por %p43, %p44
      %p46 = scmp.ne.s32.totalorder %s32, %s33
      %p47 = scmp.eq.s32.totalorder %s25, 1
      %p48 = por %p46, %p47
      %p50 = scmp.ne.s32.totalorder %s33, %s49
      %p51 = scmp.eq.s32.totalorder %s25, 0
      %p52 = por %p50, %p51
      %s53 = ssub.s32 %s19, %s26
      %p54 = scmp.eq.s32.totalorder %s53, 0
      %s56 = sadd.s32 %s55, 1
      %s57 = scalar_select %p54, %s55, %s56
      %p60 = pneg %p54
      %p61 = scmp.eq.s32.totalorder %s19, 1
      %p62 = por %p60, %p61
      %p63 = scmp.ne.s32.totalorder %s55, %s58
      %p64 = scmp.eq.s32.totalorder %s19, 0
      %p65 = por %p63, %p64
      %p66 = scmp.ne.s32.totalorder %s55, %s58
      %p67 = scmp.eq.s32.totalorder %s24, 1
      %p68 = por %p66, %p67
      %p69 = scmp.ne.s32.totalorder %s58, %s59
      %p70 = scmp.eq.s32.totalorder %s24, 0
      %p71 = por %p69, %p70
      %p72 = scmp.ne.s32.totalorder %s58, %s59
      %p73 = scmp.eq.s32.totalorder %s25, 1
      %p74 = por %p72, %p73
      %p76 = scmp.ne.s32.totalorder %s59, %s75
      %p77 = scmp.eq.s32.totalorder %s25, 0
      %p78 = por %p76, %p77
      %s80 = sadd.s32 %s79, 1
      %p83 = scmp.eq.s32.totalorder %s19, 1
      %p84 = scmp.ne.s32.totalorder %s79, %s81
      %p85 = scmp.eq.s32.totalorder %s19, 0
      %p86 = por %p84, %p85
      %p87 = scmp.ne.s32.totalorder %s79, %s81
      %p88 = scmp.eq.s32.totalorder %s24, 1
      %p89 = por %p87, %p88
      %p90 = scmp.ne.s32.totalorder %s81, %s82
      %p91 = scmp.eq.s32.totalorder %s24, 0
      %p92 = por %p90, %p91
      %p93 = scmp.ne.s32.totalorder %s81, %s82
      %p94 = scmp.eq.s32.totalorder %s25, 1
      %p95 = por %p93, %p94
      %p97 = scmp.ne.s32.totalorder %s82, %s96
      %p98 = scmp.eq.s32.totalorder %s25, 0
      %p99 = por %p97, %p98
      %s101 = sadd.s32 %s100, 1
      %p104 = scmp.eq.s32.totalorder %s19, 1
      %p105 = scmp.ne.s32.totalorder %s100, %s102
      %p106 = scmp.eq.s32.totalorder %s19, 0
      %p107 = por %p105, %p106
      %p108 = scmp.ne.s32.totalorder %s100, %s102
      %p109 = scmp.eq.s32.totalorder %s24, 1
      %p110 = por %p108, %p109
      %p111 = scmp.ne.s32.totalorder %s102, %s103
      %p112 = scmp.eq.s32.totalorder %s24, 0
      %p113 = por %p111, %p112
      %p114 = scmp.ne.s32.totalorder %s102, %s103
      %p115 = scmp.eq.s32.totalorder %s25, 1
      %p116 = por %p114, %p115
      %p118 = scmp.ne.s32.totalorder %s103, %s117
      %p119 = scmp.eq.s32.totalorder %s25, 0
      %p120 = por %p118, %p119
      %s122 = sadd.s32 %s121, 1
      %p125 = scmp.eq.s32.totalorder %s19, 1
      %p126 = scmp.ne.s32.totalorder %s121, %s123
      %p127 = scmp.eq.s32.totalorder %s19, 0
      %p128 = por %p126, %p127
      %p129 = scmp.ne.s32.totalorder %s121, %s123
      %p130 = scmp.eq.s32.totalorder %s24, 1
      %p131 = por %p129, %p130
      %p132 = scmp.ne.s32.totalorder %s123, %s124
      %p133 = scmp.eq.s32.totalorder %s24, 0
      %p134 = por %p132, %p133
      %p135 = scmp.ne.s32.totalorder %s123, %s124
      %p136 = scmp.eq.s32.totalorder %s25, 1
      %p137 = por %p135, %p136
      %p139 = scmp.ne.s32.totalorder %s124, %s138
      %p140 = scmp.eq.s32.totalorder %s25, 0
      %p141 = por %p139, %p140
      %s143 = sadd.s32 %s142, 1
      %p146 = scmp.eq.s32.totalorder %s19, 1
      %p147 = scmp.ne.s32.totalorder %s142, %s144
      %p148 = scmp.eq.s32.totalorder %s19, 0
      %p149 = por %p147, %p148
      %p150 = scmp.ne.s32.totalorder %s142, %s144
      %p151 = scmp.eq.s32.totalorder %s24, 1
      %p152 = por %p150, %p151
      %p153 = scmp.ne.s32.totalorder %s144, %s145
      %p154 = scmp.eq.s32.totalorder %s24, 0
      %p155 = por %p153, %p154
      %p156 = scmp.ne.s32.totalorder %s144, %s145
      %p157 = scmp.eq.s32.totalorder %s25, 1
      %p158 = por %p156, %p157
      %p160 = scmp.ne.s32.totalorder %s145, %s159
      %p161 = scmp.eq.s32.totalorder %s25, 0
      %p162 = por %p160, %p161
      %s164 = sadd.s32 %s163, 1
      %p167 = scmp.eq.s32.totalorder %s19, 1
      %p168 = scmp.ne.s32.totalorder %s163, %s165
      %p169 = scmp.eq.s32.totalorder %s19, 0
      %p170 = por %p168, %p169
      %p171 = scmp.ne.s32.totalorder %s163, %s165
      %p172 = scmp.eq.s32.totalorder %s24, 1
      %p173 = por %p171, %p172
      %p174 = scmp.ne.s32.totalorder %s165, %s166
      %p175 = scmp.eq.s32.totalorder %s24, 0
      %p176 = por %p174, %p175
      %p177 = scmp.ne.s32.totalorder %s165, %s166
      %p178 = scmp.eq.s32.totalorder %s25, 1
      %p179 = por %p177, %p178
      %p181 = scmp.ne.s32.totalorder %s166, %s180
      %p182 = scmp.eq.s32.totalorder %s25, 0
      %p183 = por %p181, %p182
      %s185 = sadd.s32 %s184, 1
      %p188 = scmp.eq.s32.totalorder %s19, 1
      %p189 = scmp.ne.s32.totalorder %s184, %s186
      %p190 = scmp.eq.s32.totalorder %s19, 0
      %p191 = por %p189, %p190
      %p192 = scmp.ne.s32.totalorder %s184, %s186
      %p193 = scmp.eq.s32.totalorder %s24, 1
      %p194 = por %p192, %p193
      %p195 = scmp.ne.s32.totalorder %s186, %s187
      %p196 = scmp.eq.s32.totalorder %s24, 0
      %p197 = por %p195, %p196
      %p198 = scmp.ne.s32.totalorder %s186, %s187
      %p199 = scmp.eq.s32.totalorder %s25, 1
      %p200 = por %p198, %p199
      %p202 = scmp.ne.s32.totalorder %s187, %s201
      %p203 = scmp.eq.s32.totalorder %s25, 0
      %p204 = por %p202, %p203
      %s206 = sadd.s32 %s205, 1
      %p209 = scmp.eq.s32.totalorder %s19, 1
      %p210 = scmp.ne.s32.totalorder %s205, %s207
      %p211 = scmp.eq.s32.totalorder %s19, 0
      %p212 = por %p210, %p211
      %p213 = scmp.ne.s32.totalorder %s205, %s207
      %p214 = scmp.eq.s32.totalorder %s24, 1
      %p215 = por %p213, %p214
      %p216 = scmp.ne.s32.totalorder %s207, %s208
      %p217 = scmp.eq.s32.totalorder %s24, 0
      %p218 = por %p216, %p217
      %p219 = scmp.ne.s32.totalorder %s207, %s208
      %p220 = scmp.eq.s32.totalorder %s25, 1
      %p221 = por %p219, %p220
      %p223 = scmp.ne.s32.totalorder %s208, %s222
      %p224 = scmp.eq.s32.totalorder %s25, 0
      %p225 = por %p223, %p224
      %s226 = ssub.s32 %s19, %s26
      %p227 = scmp.eq.s32.totalorder %s226, 0
      %s229 = sadd.s32 %s228, 1
      %s230 = scalar_select %p227, %s228, %s229
      %p233 = pneg %p227
      %p234 = scmp.eq.s32.totalorder %s19, 1
      %p235 = por %p233, %p234
      %p236 = scmp.ne.s32.totalorder %s228, %s231
      %p237 = scmp.eq.s32.totalorder %s19, 0
      %p238 = por %p236, %p237
      %p239 = scmp.ne.s32.totalorder %s228, %s231
      %p240 = scmp.eq.s32.totalorder %s24, 1
      %p241 = por %p239, %p240
      %p242 = scmp.ne.s32.totalorder %s231, %s232
      %p243 = scmp.eq.s32.totalorder %s24, 0
      %p244 = por %p242, %p243
      %p245 = scmp.ne.s32.totalorder %s231, %s232
      %p246 = scmp.eq.s32.totalorder %s25, 1
      %p247 = por %p245, %p246
      %p249 = scmp.ne.s32.totalorder %s232, %s248
      %p250 = scmp.eq.s32.totalorder %s25, 0
      %p251 = por %p249, %p250
      %p252 = scmp.le.s32.totalorder 1, %s19
      %p253 = scmp.lt.s32.totalorder %s19, 3
      %p254 = pnand %p252, %p253
      %p255 = pneg %p254
      // Predicated region
      $region9: #{critic_forward.1} parent=5 // pred_check
        _
      $region10: #{critic_forward.1} parent=5 // pred_check_branch
        %257 = sbr.rel (%p254) target = $region12
      $region11: #{critic_forward.1} parent=5 // pred_region
        %s258 = ssub.s32 %s19, 1
        // Predicated region
        $region13: #{critic_forward.1} parent=11 // pred_check
          %p259 = pneg %p92
        $region14: #{critic_forward.1} parent=11 // pred_check_branch
          %261 = sbr.rel (%p259) target = $region16
        $region15: #{critic_forward.1} parent=11 // pred_region
          _
        $region16: #{critic_forward.1} parent=11 // pred_fallthru
          _
        // Predicated region
        $region17: #{critic_forward.1} parent=11 // pred_check
          %p262 = pneg %p113
        $region18: #{critic_forward.1} parent=11 // pred_check_branch
          %264 = sbr.rel (%p262) target = $region20
        $region19: #{critic_forward.1} parent=11 // pred_region
          _
        $region20: #{critic_forward.1} parent=11 // pred_fallthru
          _
        // Predicated region
        $region21: #{critic_forward.1} parent=11 // pred_check
          %p265 = pneg %p134
        $region22: #{critic_forward.1} parent=11 // pred_check_branch
          %267 = sbr.rel (%p265) target = $region24
        $region23: #{critic_forward.1} parent=11 // pred_region
          _
        $region24: #{critic_forward.1} parent=11 // pred_fallthru
          _
        // Predicated region
        $region25: #{critic_forward.1} parent=11 // pred_check
          %p268 = pneg %p155
        $region26: #{critic_forward.1} parent=11 // pred_check_branch
          %270 = sbr.rel (%p268) target = $region28
        $region27: #{critic_forward.1} parent=11 // pred_region
          _
        $region28: #{critic_forward.1} parent=11 // pred_fallthru
          _
        // Predicated region
        $region29: #{critic_forward.1} parent=11 // pred_check
          %p271 = pneg %p176
        $region30: #{critic_forward.1} parent=11 // pred_check_branch
          %273 = sbr.rel (%p271) target = $region32
        $region31: #{critic_forward.1} parent=11 // pred_region
          _
        $region32: #{critic_forward.1} parent=11 // pred_fallthru
          _
        // Predicated region
        $region33: #{critic_forward.1} parent=11 // pred_check
          %p274 = pneg %p197
        $region34: #{critic_forward.1} parent=11 // pred_check_branch
          %276 = sbr.rel (%p274) target = $region36
        $region35: #{critic_forward.1} parent=11 // pred_region
          _
        $region36: #{critic_forward.1} parent=11 // pred_fallthru
          _
        // Predicated region
        $region37: #{critic_forward.1} parent=11 // pred_check
          %p277 = pneg %p218
        $region38: #{critic_forward.1} parent=11 // pred_check_branch
          %279 = sbr.rel (%p277) target = $region40
        $region39: #{critic_forward.1} parent=11 // pred_region
          _
        $region40: #{critic_forward.1} parent=11 // pred_fallthru
          _
      $region12: #{critic_forward.1} parent=5 // pred_fallthru
        _
      %p280 = scmp.lt.s32.totalorder %s19, 2
      // Predicated region
      $region41: #{critic_forward.1} parent=5 // pred_check
        %p281 = pneg %p280
      $region42: #{critic_forward.1} parent=5 // pred_check_branch
        %283 = sbr.rel (%p281) target = $region44
      $region43: #{critic_forward.1} parent=5 // pred_region
        // Predicated region
        $region45: #{critic_forward.1} parent=43 // pred_check
          %p284 = pneg %p39
        $region46: #{critic_forward.1} parent=43 // pred_check_branch
          %286 = sbr.rel (%p284) target = $region48
        $region47: #{critic_forward.1} parent=43 // pred_region
          %s287 = smul.u32 16, %s19
          %p288 = scmp.lt.s32.totalorder %s287, 31
          %s289 = scalar_select %p288, %s287, 31
          %s290 = smul.addr %s289, 3
          %s291 = smul.addr %s290, 8
          %s292 = scalar_lea.vmem %s0, %s291
          %s293 = smul.u32 16, %s19
        $region48: #{critic_forward.1} parent=43 // pred_fallthru
          _
        // Predicated region
        $region49: #{critic_forward.1} parent=43 // pred_check
          %p294 = pneg %p65
        $region50: #{critic_forward.1} parent=43 // pred_check_branch
          %296 = sbr.rel (%p294) target = $region52
        $region51: #{critic_forward.1} parent=43 // pred_region
          %s297 = smul.u32 16, %s19
          %p298 = scmp.lt.s32.totalorder %s297, 31
          %s299 = scalar_select %p298, %s297, 31
          %s300 = smul.addr %s299, 8
          %s301 = scalar_lea.vmem %s1, %s300
          %s302 = smul.u32 16, %s19
        $region52: #{critic_forward.1} parent=43 // pred_fallthru
          _
      $region44: #{critic_forward.1} parent=5 // pred_fallthru
        _
      %p303 = scmp.le.s32.totalorder 1, %s19
      %p304 = scmp.lt.s32.totalorder %s19, 3
      %p305 = pnand %p303, %p304
      %p306 = pneg %p305
      // Predicated region
      $region53: #{critic_forward.1} parent=5 // pred_check
        _
      $region54: #{critic_forward.1} parent=5 // pred_check_branch
        %308 = sbr.rel (%p305) target = $region56
      $region55: #{critic_forward.1} parent=5 // pred_region
        %s309 = ssub.s32 %s19, 1
        %s310 = smul.u32 16, %s24
        %p311 = scmp.lt.s32.totalorder %s310, 31
        %s312 = scalar_select %p311, %s310, 31
        %s313 = smul.addr %s312, 3
        %s314 = smul.addr %s313, 8
        %s315 = scalar_lea.vmem %s0, %s314
        %p316 = pneg %p45
        %p317 = pneg %p42
        %s318 = smul.u32 16, %s24
        %p319 = scmp.lt.s32.totalorder %s318, 31
        %s320 = scalar_select %p319, %s318, 31
        %s321 = smul.addr %s320, 8
        %s322 = scalar_lea.vmem %s1, %s321
        %p323 = pneg %p71
        %p324 = pneg %p68
        %p325 = pneg %p92
        %p326 = pneg %p89
        %p327 = pneg %p113
        %p328 = pneg %p110
        %p329 = pneg %p134
        %p330 = pneg %p131
        %p331 = pneg %p155
        %p332 = pneg %p152
        %p333 = pneg %p176
        %p334 = pneg %p173
        %p335 = pneg %p197
        %p336 = pneg %p194
        %p337 = pneg %p218
        %p338 = pneg %p215
        %p339 = pneg %p244
        %p340 = pneg %p241
        %s341 = sand.u32 %s231, 1
        %s342 = scalar_lea.sflag [#allocation4], %s341
        %s343 = sand.u32 %s231, 1
        %s344 = scalar_lea.vmem [#allocation3], %s343
        %s345 = smul.u32 16, %s24
        %p346 = scmp.lt.s32.totalorder %s345, 31
        %s347 = scalar_select %p346, %s345, 31
        %s348 = smul.addr %s347, 3
        %s349 = smul.addr %s348, 8
        %s350 = scalar_lea.vmem %s0, %s349
        %s351 = smul.u32 16, %s24
        %s352 = smul.u32 16, %s24
        %p353 = scmp.lt.s32.totalorder %s352, 31
        %s354 = scalar_select %p353, %s352, 31
        %s355 = smul.addr %s354, 8
        %s356 = scalar_lea.vmem %s1, %s355
        %s357 = smul.u32 16, %s24
        %v358 = vld [vmem:[%s350] sm:$0xff]
        %v359 = vld [vmem:[%s350 + $0x8] sm:$0xff]
        %v360 = vld [vmem:[%s350 + $0x10] sm:$0xff]
        %v361 = vld [vmem:[%s350 + $0x18] sm:$0xff]
        %v362 = vld [vmem:[%s350 + $0x20] sm:$0xff]
        %v363 = vld [vmem:[%s350 + $0x28] sm:$0xff]
        %v364 = vld [vmem:[%s350 + $0x30] sm:$0xff]
        %v365 = vld [vmem:[%s350 + $0x38] sm:$0xff]
        %v366 = vld [vmem:[%s350 + $0x40] sm:$0xff]
        %v367 = vld [vmem:[%s350 + $0x48] sm:$0xff]
        %v368 = vld [vmem:[%s350 + $0x50] sm:$0xff]
        %v369 = vld [vmem:[%s350 + $0x58] sm:$0xff]
        %v370 = vld [vmem:[%s350 + $0x60] sm:$0xff]
        %v371 = vld [vmem:[%s350 + $0x68] sm:$0xff]
        %v372 = vld [vmem:[%s350 + $0x70] sm:$0xff]
        %v373 = vld [vmem:[%s350 + $0x78] sm:$0xff]
        %v374 = vld [vmem:[%s350 + $0x80] sm:$0xff]
        %v375 = vld [vmem:[%s350 + $0x88] sm:$0xff]
        %v376 = vld [vmem:[%s350 + $0x90] sm:$0xff]
        %v377 = vld [vmem:[%s350 + $0x98] sm:$0xff]
        %v378 = vld [vmem:[%s350 + $0xa0] sm:$0xff]
        %v379 = vld [vmem:[%s350 + $0xa8] sm:$0xff]
        %v380 = vld [vmem:[%s350 + $0xb0] sm:$0xff]
        %v381 = vld [vmem:[%s350 + $0xb8] sm:$0xff]
        %v382 = vld [vmem:[%s350 + $0xc0] sm:$0xff]
        %v383 = vld [vmem:[%s350 + $0xc8] sm:$0xff]
        %v384 = vld [vmem:[%s350 + $0xd0] sm:$0xff]
        %v385 = vld [vmem:[%s350 + $0xd8] sm:$0xff]
        %v386 = vld [vmem:[%s350 + $0xe0] sm:$0xff]
        %v387 = vld [vmem:[%s350 + $0xe8] sm:$0xff]
        %v388 = vld [vmem:[%s350 + $0xf0] sm:$0xff]
        %v389 = vld [vmem:[%s350 + $0xf8] sm:$0xff]
        %v390 = vld [vmem:[%s350 + $0x100] sm:$0xff]
        %v391 = vld [vmem:[%s350 + $0x108] sm:$0xff]
        %v392 = vld [vmem:[%s350 + $0x110] sm:$0xff]
        %v393 = vld [vmem:[%s350 + $0x118] sm:$0xff]
        %v394 = vld [vmem:[%s350 + $0x120] sm:$0xff]
        %v395 = vld [vmem:[%s350 + $0x128] sm:$0xff]
        %v396 = vld [vmem:[%s350 + $0x130] sm:$0xff]
        %v397 = vld [vmem:[%s350 + $0x138] sm:$0xff]
        %v398 = vld [vmem:[%s350 + $0x140] sm:$0xff]
        %v399 = vld [vmem:[%s350 + $0x148] sm:$0xff]
        %v400 = vld [vmem:[%s350 + $0x150] sm:$0xff]
        %v401 = vld [vmem:[%s350 + $0x158] sm:$0xff]
        %v402 = vld [vmem:[%s350 + $0x160] sm:$0xff]
        %v403 = vld [vmem:[%s350 + $0x168] sm:$0xff]
        %v404 = vld [vmem:[%s350 + $0x170] sm:$0xff]
        %v405 = vld [vmem:[%s350 + $0x178] sm:$0xff]
        %v406 = vld [vmem:[%s2] sm:$0xff]
        %v407 = vld [vmem:[%s2 + $0x8] sm:$0xff]
        %v408 = vld [vmem:[%s2 + $0x10] sm:$0xff]
        %v409 = vld [vmem:[%s2 + $0x18] sm:$0xff]
        %v410 = vld [vmem:[%s2 + $0x20] sm:$0xff]
        %v411 = vld [vmem:[%s2 + $0x28] sm:$0xff]
        %v412 = vld [vmem:[%s2 + $0x30] sm:$0xff]
        %v413 = vld [vmem:[%s2 + $0x38] sm:$0xff]
        %v414 = vld [vmem:[%s2 + $0x40] sm:$0xff]
        %v415 = vld [vmem:[%s2 + $0x48] sm:$0xff]
        %v416 = vld [vmem:[%s2 + $0x50] sm:$0xff]
        %v417 = vld [vmem:[%s2 + $0x58] sm:$0xff]
        %v418 = vld [vmem:[%s2 + $0x60] sm:$0xff]
        %v419 = vld [vmem:[%s2 + $0x68] sm:$0xff]
        %v420 = vld [vmem:[%s2 + $0x70] sm:$0xff]
        %v421 = vld [vmem:[%s2 + $0x78] sm:$0xff]
        %v422 = vld [vmem:[%s2 + $0x80] sm:$0xff]
        %v423 = vld [vmem:[%s2 + $0x88] sm:$0xff]
        %v424 = vld [vmem:[%s2 + $0x90] sm:$0xff]
        %v425 = vld [vmem:[%s2 + $0x98] sm:$0xff]
        %v426 = vld [vmem:[%s2 + $0xa0] sm:$0xff]
        %v427 = vld [vmem:[%s2 + $0xa8] sm:$0xff]
        %v428 = vld [vmem:[%s2 + $0xb0] sm:$0xff]
        %v429 = vld [vmem:[%s2 + $0xb8] sm:$0xff]
        %v430 = vld [vmem:[%s2 + $0xc0] sm:$0xff]
        %v431 = vld [vmem:[%s2 + $0xc8] sm:$0xff]
        %v432 = vld [vmem:[%s2 + $0xd0] sm:$0xff]
        %v433 = vld [vmem:[%s2 + $0xd8] sm:$0xff]
        %v434 = vld [vmem:[%s2 + $0xe0] sm:$0xff]
        %v435 = vld [vmem:[%s2 + $0xe8] sm:$0xff]
        %v436 = vld [vmem:[%s2 + $0xf0] sm:$0xff]
        %v437 = vld [vmem:[%s2 + $0xf8] sm:$0xff]
        %v438 = vld [vmem:[%s2 + $0x100] sm:$0xff]
        %v439 = vld [vmem:[%s2 + $0x108] sm:$0xff]
        %v440 = vld [vmem:[%s2 + $0x110] sm:$0xff]
        %v441 = vld [vmem:[%s2 + $0x118] sm:$0xff]
        %v442 = vld [vmem:[%s2 + $0x120] sm:$0xff]
        %v443 = vld [vmem:[%s2 + $0x128] sm:$0xff]
        %v444 = vld [vmem:[%s2 + $0x130] sm:$0xff]
        %v445 = vld [vmem:[%s2 + $0x138] sm:$0xff]
        %v446 = vld [vmem:[%s2 + $0x140] sm:$0xff]
        %v447 = vld [vmem:[%s2 + $0x148] sm:$0xff]
        %v448 = vld [vmem:[%s2 + $0x150] sm:$0xff]
        %v449 = vld [vmem:[%s2 + $0x158] sm:$0xff]
        %v450 = vld [vmem:[%s2 + $0x160] sm:$0xff]
        %v451 = vld [vmem:[%s2 + $0x168] sm:$0xff]
        %v452 = vld [vmem:[%s2 + $0x170] sm:$0xff]
        %v453 = vld [vmem:[%s2 + $0x178] sm:$0xff]
        %v454 = vld [vmem:[%s2 + $0x180] sm:$0xff]
        %v455 = vld [vmem:[%s2 + $0x188] sm:$0xff]
        %v456 = vld [vmem:[%s2 + $0x190] sm:$0xff]
        %v457 = vld [vmem:[%s2 + $0x198] sm:$0xff]
        %v458 = vld [vmem:[%s2 + $0x1a0] sm:$0xff]
        %v459 = vld [vmem:[%s2 + $0x1a8] sm:$0xff]
        %v460 = vld [vmem:[%s2 + $0x1b0] sm:$0xff]
        %v461 = vld [vmem:[%s2 + $0x1b8] sm:$0xff]
        %v462 = vld [vmem:[%s2 + $0x1c0] sm:$0xff]
        %v463 = vld [vmem:[%s2 + $0x1c8] sm:$0xff]
        %v464 = vld [vmem:[%s2 + $0x1d0] sm:$0xff]
        %v465 = vld [vmem:[%s2 + $0x1d8] sm:$0xff]
        %v466 = vld [vmem:[%s2 + $0x1e0] sm:$0xff]
        %v467 = vld [vmem:[%s2 + $0x1e8] sm:$0xff]
        %v468 = vld [vmem:[%s2 + $0x1f0] sm:$0xff]
        %v469 = vld [vmem:[%s2 + $0x1f8] sm:$0xff]
        %v470 = vld [vmem:[%s2 + $0x200] sm:$0xff]
        %v471 = vld [vmem:[%s2 + $0x208] sm:$0xff]
        %v472 = vld [vmem:[%s2 + $0x210] sm:$0xff]
        %v473 = vld [vmem:[%s2 + $0x218] sm:$0xff]
        %v474 = vld [vmem:[%s2 + $0x220] sm:$0xff]
        %v475 = vld [vmem:[%s2 + $0x228] sm:$0xff]
        %v476 = vld [vmem:[%s2 + $0x230] sm:$0xff]
        %v477 = vld [vmem:[%s2 + $0x238] sm:$0xff]
        %v478 = vld [vmem:[%s2 + $0x240] sm:$0xff]
        %v479 = vld [vmem:[%s2 + $0x248] sm:$0xff]
        %v480 = vld [vmem:[%s2 + $0x250] sm:$0xff]
        %v481 = vld [vmem:[%s2 + $0x258] sm:$0xff]
        %v482 = vld [vmem:[%s2 + $0x260] sm:$0xff]
        %v483 = vld [vmem:[%s2 + $0x268] sm:$0xff]
        %v484 = vld [vmem:[%s2 + $0x270] sm:$0xff]
        %v485 = vld [vmem:[%s2 + $0x278] sm:$0xff]
        %v486 = vld [vmem:[%s2 + $0x280] sm:$0xff]
        %v487 = vld [vmem:[%s2 + $0x288] sm:$0xff]
        %v488 = vld [vmem:[%s2 + $0x290] sm:$0xff]
        %v489 = vld [vmem:[%s2 + $0x298] sm:$0xff]
        %v490 = vld [vmem:[%s2 + $0x2a0] sm:$0xff]
        %v491 = vld [vmem:[%s2 + $0x2a8] sm:$0xff]
        %v492 = vld [vmem:[%s2 + $0x2b0] sm:$0xff]
        %v493 = vld [vmem:[%s2 + $0x2b8] sm:$0xff]
        %v494 = vld [vmem:[%s2 + $0x2c0] sm:$0xff]
        %v495 = vld [vmem:[%s2 + $0x2c8] sm:$0xff]
        %v496 = vld [vmem:[%s2 + $0x2d0] sm:$0xff]
        %v497 = vld [vmem:[%s2 + $0x2d8] sm:$0xff]
        %v498 = vld [vmem:[%s2 + $0x2e0] sm:$0xff]
        %v499 = vld [vmem:[%s2 + $0x2e8] sm:$0xff]
        %v500 = vld [vmem:[%s356] sm:$0xff]
        %v501 = vld [vmem:[%s356 + $0x8] sm:$0xff]
        %v502 = vld [vmem:[%s356 + $0x10] sm:$0xff]
        %v503 = vld [vmem:[%s356 + $0x18] sm:$0xff]
        %v504 = vld [vmem:[%s356 + $0x20] sm:$0xff]
        %v505 = vld [vmem:[%s356 + $0x28] sm:$0xff]
        %v506 = vld [vmem:[%s356 + $0x30] sm:$0xff]
        %v507 = vld [vmem:[%s356 + $0x38] sm:$0xff]
        %v508 = vld [vmem:[%s356 + $0x40] sm:$0xff]
        %v509 = vld [vmem:[%s356 + $0x48] sm:$0xff]
        %v510 = vld [vmem:[%s356 + $0x50] sm:$0xff]
        %v511 = vld [vmem:[%s356 + $0x58] sm:$0xff]
        %v512 = vld [vmem:[%s356 + $0x60] sm:$0xff]
        %v513 = vld [vmem:[%s356 + $0x68] sm:$0xff]
        %v514 = vld [vmem:[%s356 + $0x70] sm:$0xff]
        %v515 = vld [vmem:[%s356 + $0x78] sm:$0xff]
        %v516 = vld [vmem:[%s3] sm:$0xff]
        %v517 = vld [vmem:[%s3 + $0x8] sm:$0xff]
        %v518 = vld [vmem:[%s3 + $0x10] sm:$0xff]
        %v519 = vld [vmem:[%s3 + $0x18] sm:$0xff]
        %v520 = vld [vmem:[%s3 + $0x20] sm:$0x1]
        %v521 = vld [vmem:[%s3 + $0x28] sm:$0x1]
        %vm522 = vcmask 138240
        %v524 = vsel %vm522, %v500, 0
        %v527 = vsel %vm522, %v501, 0
        %v530 = vsel %vm522, %v502, 0
        %v533 = vsel %vm522, %v503, 0
        %v536 = vsel %vm522, %v504, 0
        %v539 = vsel %vm522, %v505, 0
        %v542 = vsel %vm522, %v506, 0
        %v545 = vsel %vm522, %v507, 0
        %v548 = vsel %vm522, %v508, 0
        %v551 = vsel %vm522, %v509, 0
        %v554 = vsel %vm522, %v510, 0
        %v557 = vsel %vm522, %v511, 0
        %v560 = vsel %vm522, %v512, 0
        %v563 = vsel %vm522, %v513, 0
        %v566 = vsel %vm522, %v514, 0
        %v569 = vsel %vm522, %v515, 0
        %vm571 = vcmask 1040384
        %v573 = vsel %vm571, %v520, 0
        %v576 = vsel %vm571, %v521, 0
        %578 = vmatprep.subr.mxu0 %v517
        %579 = vmatpush1.msra.mxu0 %v516
        %580 = vmatprep.subr.mxu0 %v519
        %581 = vmatpush1.msra.mxu0 %v518
        %582 = vmatprep.subr.mxu0 %v576
        %583 = vmatpush1.msra.mxu0 %v573
        %584 = vmatprep.subr.mxu0 0.0
        %585 = vmatpush1.msra.mxu0 0.0
        %586 = vmatprep.subr.mxu0 0.0
        %587 = vmatpush1.msra.mxu0 0.0
        %588 = vmatprep.subr.mxu0 0.0
        %589 = vmatpush1.msra.mxu0 0.0
        %590 = vmatprep.subr.mxu0 0.0
        %591 = vmatpush1.msra.mxu0 0.0
        %592 = vmatprep.subr.mxu0 0.0
        %593 = vmatpush1.msra.mxu0 0.0
        %594 = vmatprep.subr.mxu0 0.0
        %595 = vmatpush1.msra.mxu0 0.0
        %596 = vmatprep.subr.mxu0 0.0
        %597 = vmatpush1.msra.mxu0 0.0
        %598 = vmatprep.subr.mxu0 0.0
        %599 = vmatpush1.msra.mxu0 0.0
        %600 = vmatprep.subr.mxu0 0.0
        %601 = vmatpush1.msra.mxu0 0.0
        %602 = vmatprep.subr.mxu0 0.0
        %603 = vmatpush1.msra.mxu0 0.0
        %604 = vmatprep.subr.mxu0 0.0
        %605 = vmatpush1.msra.mxu0 0.0
        %606 = vmatprep.subr.mxu0 0.0
        %607 = vmatpush1.msra.mxu0 0.0
        %608 = vmatprep.subr.mxu0 0.0
        %609 = vmatpush1.msra.mxu0 0.0
        %610 = vmatprep.subr.mxu0 0.0
        %611 = vmatpush1.msra.mxu0 0.0
        %612 = vmatprep.subr.mxu0 0.0
        %613 = vmatpush1.msra.mxu0 0.0
        %614 = vmatprep.subr.mxu0 0.0
        %615 = vmatpush1.msra.mxu0 0.0
        %616 = vmatprep.subr.mxu0 0.0
        %617 = vmatpush1.msra.mxu0 0.0
        %618 = vmatprep.subr.mxu0 0.0
        %619 = vmatpush1.msra.mxu0 0.0
        %620 = vmatprep.subr.mxu0 0.0
        %621 = vmatpush1.msra.mxu0 0.0
        %622 = vmatprep.subr.mxu0 0.0
        %623 = vmatpush1.msra.mxu0 0.0
        %624 = vmatprep.subr.mxu0 0.0
        %625 = vmatpush1.msra.mxu0 0.0
        %626 = vmatprep.subr.mxu0 0.0
        %627 = vmatpush1.msra.mxu0 0.0
        %628 = vmatprep.subr.mxu0 0.0
        %629 = vmatpush1.msra.mxu0 0.0
        %630 = vmatprep.subr.mxu0 0.0
        %631 = vmatpush1.msra.mxu0 0.0
        %632 = vmatprep.subr.mxu0 0.0
        %633 = vmatpush1.msra.mxu0 0.0
        %634 = vmatprep.subr.mxu0 0.0
        %635 = vmatpush1.msra.mxu0 0.0
        %636 = vmatprep.subr.mxu0 0.0
        %637 = vmatpush1.msra.mxu0 0.0
        %638 = vmatprep.subr.mxu0 0.0
        %639 = vmatpush1.msra.mxu0 0.0
        %640 = vmatprep.subr.mxu0 0.0
        %641 = vmatpush1.msra.mxu0 0.0
        %642 = vmatprep.mubr.f32.mxu0 0.0
        %643 = vmatmul.mubr.f32.gmra.mrb[0].mxu0 %v524
        %v644 = vpop.f32.mrb[0].mxu0
        %v645 = vadd.f32 0.0, %v644
        %v646 = vpop.f32.mrb[0].mxu0
        %v647 = vadd.f32 0.0, %v646
        %648 = vmatprep.mubr.f32.mxu0 0.0
        %649 = vmatmul.mubr.f32.gmra.mrb[0].mxu0 %v527
        %v650 = vpop.f32.mrb[0].mxu0
        %v651 = vadd.f32 0.0, %v650
        %v652 = vpop.f32.mrb[0].mxu0
        %v653 = vadd.f32 0.0, %v652
        %654 = vmatprep.mubr.f32.mxu0 0.0
        %655 = vmatmul.mubr.f32.gmra.mrb[0].mxu0 %v530
        %v656 = vpop.f32.mrb[0].mxu0
        %v657 = vadd.f32 0.0, %v656
        %v658 = vpop.f32.mrb[0].mxu0
        %v659 = vadd.f32 0.0, %v658
        %660 = vmatprep.mubr.f32.mxu0 0.0
        %661 = vmatmul.mubr.f32.gmra.mrb[0].mxu0 %v533
        %v662 = vpop.f32.mrb[0].mxu0
        %v663 = vadd.f32 0.0, %v662
        %v664 = vpop.f32.mrb[0].mxu0
        %v665 = vadd.f32 0.0, %v664
        %666 = vmatprep.mubr.f32.mxu0 0.0
        %667 = vmatmul.mubr.f32.gmra.mrb[0].mxu0 %v536
        %v668 = vpop.f32.mrb[0].mxu0
        %v669 = vadd.f32 0.0, %v668
        %v670 = vpop.f32.mrb[0].mxu0
        %v671 = vadd.f32 0.0, %v670
        %672 = vmatprep.mubr.f32.mxu0 0.0
        %673 = vmatmul.mubr.f32.gmra.mrb[0].mxu0 %v539
        %v674 = vpop.f32.mrb[0].mxu0
        %v675 = vadd.f32 0.0, %v674
        %v676 = vpop.f32.mrb[0].mxu0
        %v677 = vadd.f32 0.0, %v676
        %678 = vmatprep.mubr.f32.mxu0 0.0
        %679 = vmatmul.mubr.f32.gmra.mrb[0].mxu0 %v542
        %v680 = vpop.f32.mrb[0].mxu0
        %v681 = vadd.f32 0.0, %v680
        %v682 = vpop.f32.mrb[0].mxu0
        %v683 = vadd.f32 0.0, %v682
        %684 = vmatprep.mubr.f32.mxu0 0.0
        %685 = vmatmul.mubr.f32.gmra.mrb[0].mxu0 %v545
        %v686 = vpop.f32.mrb[0].mxu0
        %v687 = vadd.f32 0.0, %v686
        %v688 = vpop.f32.mrb[0].mxu0
        %v689 = vadd.f32 0.0, %v688
        %690 = vmatprep.mubr.f32.mxu0 0.0
        %691 = vmatmul.mubr.f32.gmra.mrb[0].mxu0 %v548
        %v692 = vpop.f32.mrb[0].mxu0
        %v693 = vadd.f32 0.0, %v692
        %v694 = vpop.f32.mrb[0].mxu0
        %v695 = vadd.f32 0.0, %v694
        %696 = vmatprep.mubr.f32.mxu0 0.0
        %697 = vmatmul.mubr.f32.gmra.mrb[0].mxu0 %v551
        %v698 = vpop.f32.mrb[0].mxu0
        %v699 = vadd.f32 0.0, %v698
        %v700 = vpop.f32.mrb[0].mxu0
        %v701 = vadd.f32 0.0, %v700
        %702 = vmatprep.mubr.f32.mxu0 0.0
        %703 = vmatmul.mubr.f32.gmra.mrb[0].mxu0 %v554
        %v704 = vpop.f32.mrb[0].mxu0
        %v705 = vadd.f32 0.0, %v704
        %v706 = vpop.f32.mrb[0].mxu0
        %v707 = vadd.f32 0.0, %v706
        %708 = vmatprep.mubr.f32.mxu0 0.0
        %709 = vmatmul.mubr.f32.gmra.mrb[0].mxu0 %v557
        %v710 = vpop.f32.mrb[0].mxu0
        %v711 = vadd.f32 0.0, %v710
        %v712 = vpop.f32.mrb[0].mxu0
        %v713 = vadd.f32 0.0, %v712
        %714 = vmatprep.mubr.f32.mxu0 0.0
        %715 = vmatmul.mubr.f32.gmra.mrb[0].mxu0 %v560
        %v716 = vpop.f32.mrb[0].mxu0
        %v717 = vadd.f32 0.0, %v716
        %v718 = vpop.f32.mrb[0].mxu0
        %v719 = vadd.f32 0.0, %v718
        %720 = vmatprep.mubr.f32.mxu0 0.0
        %721 = vmatmul.mubr.f32.gmra.mrb[0].mxu0 %v563
        %v722 = vpop.f32.mrb[0].mxu0
        %v723 = vadd.f32 0.0, %v722
        %v724 = vpop.f32.mrb[0].mxu0
        %v725 = vadd.f32 0.0, %v724
        %726 = vmatprep.mubr.f32.mxu0 0.0
        %727 = vmatmul.mubr.f32.gmra.mrb[0].mxu0 %v566
        %v728 = vpop.f32.mrb[0].mxu0
        %v729 = vadd.f32 0.0, %v728
        %v730 = vpop.f32.mrb[0].mxu0
        %v731 = vadd.f32 0.0, %v730
        %732 = vmatprep.mubr.f32.mxu0 0.0
        %733 = vmatmul.mubr.f32.gmra.mrb[0].mxu0 %v569
        %v734 = vpop.f32.mrb[0].mxu0
        %v735 = vadd.f32 0.0, %v734
        %v736 = vpop.f32.mrb[0].mxu0
        %v737 = vadd.f32 0.0, %v736
        %738 = vdwg.mxu0
        %vm739 = vcmask 982016
        %v741 = vsel %vm739, %v360, 0
        %v744 = vsel %vm739, %v363, 0
        %v747 = vsel %vm739, %v366, 0
        %v750 = vsel %vm739, %v369, 0
        %v753 = vsel %vm739, %v372, 0
        %v756 = vsel %vm739, %v375, 0
        %v759 = vsel %vm739, %v378, 0
        %v762 = vsel %vm739, %v381, 0
        %v765 = vsel %vm739, %v384, 0
        %v768 = vsel %vm739, %v387, 0
        %v771 = vsel %vm739, %v390, 0
        %v774 = vsel %vm739, %v393, 0
        %v777 = vsel %vm739, %v396, 0
        %v780 = vsel %vm739, %v399, 0
        %v783 = vsel %vm739, %v402, 0
        %v786 = vsel %vm739, %v405, 0
        %788 = vmatprep.subr.mxu0 %v407
        %789 = vmatpush1.msra.mxu0 %v406
        %790 = vmatprep.subr.mxu0 %v409
        %791 = vmatpush1.msra.mxu0 %v408
        %792 = vmatprep.subr.mxu0 %v411
        %793 = vmatpush1.msra.mxu0 %v410
        %794 = vmatprep.subr.mxu0 %v413
        %795 = vmatpush1.msra.mxu0 %v412
        %796 = vmatprep.subr.mxu0 %v415
        %797 = vmatpush1.msra.mxu0 %v414
        %798 = vmatprep.subr.mxu0 %v417
        %799 = vmatpush1.msra.mxu0 %v416
        %800 = vmatprep.subr.mxu0 %v419
        %801 = vmatpush1.msra.mxu0 %v418
        %802 = vmatprep.subr.mxu0 %v421
        %803 = vmatpush1.msra.mxu0 %v420
        %804 = vmatprep.subr.mxu0 %v423
        %805 = vmatpush1.msra.mxu0 %v422
        %806 = vmatprep.subr.mxu0 %v425
        %807 = vmatpush1.msra.mxu0 %v424
        %808 = vmatprep.subr.mxu0 %v427
        %809 = vmatpush1.msra.mxu0 %v426
        %810 = vmatprep.subr.mxu0 %v429
        %811 = vmatpush1.msra.mxu0 %v428
        %812 = vmatprep.subr.mxu0 %v431
        %813 = vmatpush1.msra.mxu0 %v430
        %814 = vmatprep.subr.mxu0 %v433
        %815 = vmatpush1.msra.mxu0 %v432
        %816 = vmatprep.subr.mxu0 %v435
        %817 = vmatpush1.msra.mxu0 %v434
        %818 = vmatprep.subr.mxu0 %v437
        %819 = vmatpush1.msra.mxu0 %v436
        %820 = vmatprep.subr.mxu0 %v439
        %821 = vmatpush1.msra.mxu0 %v438
        %822 = vmatprep.subr.mxu0 %v441
        %823 = vmatpush1.msra.mxu0 %v440
        %824 = vmatprep.subr.mxu0 %v443
        %825 = vmatpush1.msra.mxu0 %v442
        %826 = vmatprep.subr.mxu0 %v445
        %827 = vmatpush1.msra.mxu0 %v444
        %828 = vmatprep.subr.mxu0 %v447
        %829 = vmatpush1.msra.mxu0 %v446
        %830 = vmatprep.subr.mxu0 %v449
        %831 = vmatpush1.msra.mxu0 %v448
        %832 = vmatprep.subr.mxu0 %v451
        %833 = vmatpush1.msra.mxu0 %v450
        %834 = vmatprep.subr.mxu0 %v453
        %835 = vmatpush1.msra.mxu0 %v452
        %836 = vmatprep.subr.mxu0 %v455
        %837 = vmatpush1.msra.mxu0 %v454
        %838 = vmatprep.subr.mxu0 %v457
        %839 = vmatpush1.msra.mxu0 %v456
        %840 = vmatprep.subr.mxu0 %v459
        %841 = vmatpush1.msra.mxu0 %v458
        %842 = vmatprep.subr.mxu0 %v461
        %843 = vmatpush1.msra.mxu0 %v460
        %844 = vmatprep.subr.mxu0 %v463
        %845 = vmatpush1.msra.mxu0 %v462
        %846 = vmatprep.subr.mxu0 %v465
        %847 = vmatpush1.msra.mxu0 %v464
        %848 = vmatprep.subr.mxu0 %v467
        %849 = vmatpush1.msra.mxu0 %v466
        %850 = vmatprep.subr.mxu0 %v469
        %851 = vmatpush1.msra.mxu0 %v468
        %852 = vmatprep.mubr.f32.mxu0 %v359
        %853 = vmatmul.mubr.f32.gmra.mrb[0].mxu0 %v358
        %v854 = vpop.f32.mrb[0].mxu0
        %v855 = vadd.f32 %v645, %v854
        %v856 = vpop.f32.mrb[0].mxu0
        %v857 = vadd.f32 %v647, %v856
        %858 = vmatprep.mubr.f32.mxu0 %v362
        %859 = vmatmul.mubr.f32.gmra.mrb[0].mxu0 %v361
        %v860 = vpop.f32.mrb[0].mxu0
        %v861 = vadd.f32 %v651, %v860
        %v862 = vpop.f32.mrb[0].mxu0
        %v863 = vadd.f32 %v653, %v862
        %864 = vmatprep.mubr.f32.mxu0 %v365
        %865 = vmatmul.mubr.f32.gmra.mrb[0].mxu0 %v364
        %v866 = vpop.f32.mrb[0].mxu0
        %v867 = vadd.f32 %v657, %v866
        %v868 = vpop.f32.mrb[0].mxu0
        %v869 = vadd.f32 %v659, %v868
        %870 = vmatprep.mubr.f32.mxu0 %v368
        %871 = vmatmul.mubr.f32.gmra.mrb[0].mxu0 %v367
        %v872 = vpop.f32.mrb[0].mxu0
        %v873 = vadd.f32 %v663, %v872
        %v874 = vpop.f32.mrb[0].mxu0
        %v875 = vadd.f32 %v665, %v874
        %876 = vmatprep.mubr.f32.mxu0 %v371
        %877 = vmatmul.mubr.f32.gmra.mrb[0].mxu0 %v370
        %v878 = vpop.f32.mrb[0].mxu0
        %v879 = vadd.f32 %v669, %v878
        %v880 = vpop.f32.mrb[0].mxu0
        %v881 = vadd.f32 %v671, %v880
        %882 = vmatprep.mubr.f32.mxu0 %v374
        %883 = vmatmul.mubr.f32.gmra.mrb[0].mxu0 %v373
        %v884 = vpop.f32.mrb[0].mxu0
        %v885 = vadd.f32 %v675, %v884
        %v886 = vpop.f32.mrb[0].mxu0
        %v887 = vadd.f32 %v677, %v886
        %888 = vmatprep.mubr.f32.mxu0 %v377
        %889 = vmatmul.mubr.f32.gmra.mrb[0].mxu0 %v376
        %v890 = vpop.f32.mrb[0].mxu0
        %v891 = vadd.f32 %v681, %v890
        %v892 = vpop.f32.mrb[0].mxu0
        %v893 = vadd.f32 %v683, %v892
        %894 = vmatprep.mubr.f32.mxu0 %v380
        %895 = vmatmul.mubr.f32.gmra.mrb[0].mxu0 %v379
        %v896 = vpop.f32.mrb[0].mxu0
        %v897 = vadd.f32 %v687, %v896
        %v898 = vpop.f32.mrb[0].mxu0
        %v899 = vadd.f32 %v689, %v898
        %900 = vmatprep.mubr.f32.mxu0 %v383
        %901 = vmatmul.mubr.f32.gmra.mrb[0].mxu0 %v382
        %v902 = vpop.f32.mrb[0].mxu0
        %v903 = vadd.f32 %v693, %v902
        %v904 = vpop.f32.mrb[0].mxu0
        %v905 = vadd.f32 %v695, %v904
        %906 = vmatprep.mubr.f32.mxu0 %v386
        %907 = vmatmul.mubr.f32.gmra.mrb[0].mxu0 %v385
        %v908 = vpop.f32.mrb[0].mxu0
        %v909 = vadd.f32 %v699, %v908
        %v910 = vpop.f32.mrb[0].mxu0
        %v911 = vadd.f32 %v701, %v910
        %912 = vmatprep.mubr.f32.mxu0 %v389
        %913 = vmatmul.mubr.f32.gmra.mrb[0].mxu0 %v388
        %v914 = vpop.f32.mrb[0].mxu0
        %v915 = vadd.f32 %v705, %v914
        %v916 = vpop.f32.mrb[0].mxu0
        %v917 = vadd.f32 %v707, %v916
        %918 = vmatprep.mubr.f32.mxu0 %v392
        %919 = vmatmul.mubr.f32.gmra.mrb[0].mxu0 %v391
        %v920 = vpop.f32.mrb[0].mxu0
        %v921 = vadd.f32 %v711, %v920
        %v922 = vpop.f32.mrb[0].mxu0
        %v923 = vadd.f32 %v713, %v922
        %924 = vmatprep.mubr.f32.mxu0 %v395
        %925 = vmatmul.mubr.f32.gmra.mrb[0].mxu0 %v394
        %v926 = vpop.f32.mrb[0].mxu0
        %v927 = vadd.f32 %v717, %v926
        %v928 = vpop.f32.mrb[0].mxu0
        %v929 = vadd.f32 %v719, %v928
        %930 = vmatprep.mubr.f32.mxu0 %v398
        %931 = vmatmul.mubr.f32.gmra.mrb[0].mxu0 %v397
        %v932 = vpop.f32.mrb[0].mxu0
        %v933 = vadd.f32 %v723, %v932
        %v934 = vpop.f32.mrb[0].mxu0
        %v935 = vadd.f32 %v725, %v934
        %936 = vmatprep.mubr.f32.mxu0 %v401
        %937 = vmatmul.mubr.f32.gmra.mrb[0].mxu0 %v400
        %v938 = vpop.f32.mrb[0].mxu0
        %v939 = vadd.f32 %v729, %v938
        %v940 = vpop.f32.mrb[0].mxu0
        %v941 = vadd.f32 %v731, %v940
        %942 = vmatprep.mubr.f32.mxu0 %v404
        %943 = vmatmul.mubr.f32.gmra.mrb[0].mxu0 %v403
        %v944 = vpop.f32.mrb[0].mxu0
        %v945 = vadd.f32 %v735, %v944
        %v946 = vpop.f32.mrb[0].mxu0
        %v947 = vadd.f32 %v737, %v946
        %948 = vdwg.mxu0
        %949 = vmatprep.subr.mxu0 %v471
        %950 = vmatpush1.msra.mxu0 %v470
        %951 = vmatprep.subr.mxu0 %v473
        %952 = vmatpush1.msra.mxu0 %v472
        %953 = vmatprep.subr.mxu0 %v475
        %954 = vmatpush1.msra.mxu0 %v474
        %955 = vmatprep.subr.mxu0 %v477
        %956 = vmatpush1.msra.mxu0 %v476
        %957 = vmatprep.subr.mxu0 %v479
        %958 = vmatpush1.msra.mxu0 %v478
        %959 = vmatprep.subr.mxu0 %v481
        %960 = vmatpush1.msra.mxu0 %v480
        %961 = vmatprep.subr.mxu0 %v483
        %962 = vmatpush1.msra.mxu0 %v482
        %963 = vmatprep.subr.mxu0 %v485
        %964 = vmatpush1.msra.mxu0 %v484
        %965 = vmatprep.subr.mxu0 %v487
        %966 = vmatpush1.msra.mxu0 %v486
        %967 = vmatprep.subr.mxu0 %v489
        %968 = vmatpush1.msra.mxu0 %v488
        %969 = vmatprep.subr.mxu0 %v491
        %970 = vmatpush1.msra.mxu0 %v490
        %971 = vmatprep.subr.mxu0 %v493
        %972 = vmatpush1.msra.mxu0 %v492
        %973 = vmatprep.subr.mxu0 %v495
        %974 = vmatpush1.msra.mxu0 %v494
        %975 = vmatprep.subr.mxu0 %v497
        %976 = vmatpush1.msra.mxu0 %v496
        %977 = vmatprep.subr.mxu0 %v499
        %978 = vmatpush1.msra.mxu0 %v498
        %979 = vmatprep.subr.mxu0 0.0
        %980 = vmatpush1.msra.mxu0 0.0
        %981 = vmatprep.subr.mxu0 0.0
        %982 = vmatpush1.msra.mxu0 0.0
        %983 = vmatprep.subr.mxu0 0.0
        %984 = vmatpush1.msra.mxu0 0.0
        %985 = vmatprep.subr.mxu0 0.0
        %986 = vmatpush1.msra.mxu0 0.0
        %987 = vmatprep.subr.mxu0 0.0
        %988 = vmatpush1.msra.mxu0 0.0
        %989 = vmatprep.subr.mxu0 0.0
        %990 = vmatpush1.msra.mxu0 0.0
        %991 = vmatprep.subr.mxu0 0.0
        %992 = vmatpush1.msra.mxu0 0.0
        %993 = vmatprep.subr.mxu0 0.0
        %994 = vmatpush1.msra.mxu0 0.0
        %995 = vmatprep.subr.mxu0 0.0
        %996 = vmatpush1.msra.mxu0 0.0
        %997 = vmatprep.subr.mxu0 0.0
        %998 = vmatpush1.msra.mxu0 0.0
        %999 = vmatprep.subr.mxu0 0.0
        %1000 = vmatpush1.msra.mxu0 0.0
        %1001 = vmatprep.subr.mxu0 0.0
        %1002 = vmatpush1.msra.mxu0 0.0
        %1003 = vmatprep.subr.mxu0 0.0
        %1004 = vmatpush1.msra.mxu0 0.0
        %1005 = vmatprep.subr.mxu0 0.0
        %1006 = vmatpush1.msra.mxu0 0.0
        %1007 = vmatprep.subr.mxu0 0.0
        %1008 = vmatpush1.msra.mxu0 0.0
        %1009 = vmatprep.subr.mxu0 0.0
        %1010 = vmatpush1.msra.mxu0 0.0
        %1011 = vmatprep.subr.mxu0 0.0
        %1012 = vmatpush1.msra.mxu0 0.0
        %1013 = vmatprep.mubr.f32.mxu0 0.0
        %1014 = vmatmul.mubr.f32.gmra.mrb[0].mxu0 %v741
        %v1015 = vpop.f32.mrb[0].mxu0
        %v1016 = vadd.f32 %v855, %v1015
        %v1017 = vpop.f32.mrb[0].mxu0
        %v1018 = vadd.f32 %v857, %v1017
        %1019 = vmatprep.mubr.f32.mxu0 0.0
        %1020 = vmatmul.mubr.f32.gmra.mrb[0].mxu0 %v744
        %v1021 = vpop.f32.mrb[0].mxu0
        %v1022 = vadd.f32 %v861, %v1021
        %v1023 = vpop.f32.mrb[0].mxu0
        %v1024 = vadd.f32 %v863, %v1023
        %1025 = vmatprep.mubr.f32.mxu0 0.0
        %1026 = vmatmul.mubr.f32.gmra.mrb[0].mxu0 %v747
        %v1027 = vpop.f32.mrb[0].mxu0
        %v1028 = vadd.f32 %v867, %v1027
        %v1029 = vpop.f32.mrb[0].mxu0
        %v1030 = vadd.f32 %v869, %v1029
        %1031 = vmatprep.mubr.f32.mxu0 0.0
        %1032 = vmatmul.mubr.f32.gmra.mrb[0].mxu0 %v750
        %v1033 = vpop.f32.mrb[0].mxu0
        %v1034 = vadd.f32 %v873, %v1033
        %v1035 = vpop.f32.mrb[0].mxu0
        %v1036 = vadd.f32 %v875, %v1035
        %1037 = vmatprep.mubr.f32.mxu0 0.0
        %1038 = vmatmul.mubr.f32.gmra.mrb[0].mxu0 %v753
        %v1039 = vpop.f32.mrb[0].mxu0
        %v1040 = vadd.f32 %v879, %v1039
        %v1041 = vpop.f32.mrb[0].mxu0
        %v1042 = vadd.f32 %v881, %v1041
        %1043 = vmatprep.mubr.f32.mxu0 0.0
        %1044 = vmatmul.mubr.f32.gmra.mrb[0].mxu0 %v756
        %v1045 = vpop.f32.mrb[0].mxu0
        %v1046 = vadd.f32 %v885, %v1045
        %v1047 = vpop.f32.mrb[0].mxu0
        %v1048 = vadd.f32 %v887, %v1047
        %1049 = vmatprep.mubr.f32.mxu0 0.0
        %1050 = vmatmul.mubr.f32.gmra.mrb[0].mxu0 %v759
        %v1051 = vpop.f32.mrb[0].mxu0
        %v1052 = vadd.f32 %v891, %v1051
        %v1053 = vpop.f32.mrb[0].mxu0
        %v1054 = vadd.f32 %v893, %v1053
        %1055 = vmatprep.mubr.f32.mxu0 0.0
        %1056 = vmatmul.mubr.f32.gmra.mrb[0].mxu0 %v762
        %v1057 = vpop.f32.mrb[0].mxu0
        %v1058 = vadd.f32 %v897, %v1057
        %v1059 = vpop.f32.mrb[0].mxu0
        %v1060 = vadd.f32 %v899, %v1059
        %1061 = vmatprep.mubr.f32.mxu0 0.0
        %1062 = vmatmul.mubr.f32.gmra.mrb[0].mxu0 %v765
        %v1063 = vpop.f32.mrb[0].mxu0
        %v1064 = vadd.f32 %v903, %v1063
        %v1065 = vpop.f32.mrb[0].mxu0
        %v1066 = vadd.f32 %v905, %v1065
        %1067 = vmatprep.mubr.f32.mxu0 0.0
        %1068 = vmatmul.mubr.f32.gmra.mrb[0].mxu0 %v768
        %v1069 = vpop.f32.mrb[0].mxu0
        %v1070 = vadd.f32 %v909, %v1069
        %v1071 = vpop.f32.mrb[0].mxu0
        %v1072 = vadd.f32 %v911, %v1071
        %1073 = vmatprep.mubr.f32.mxu0 0.0
        %1074 = vmatmul.mubr.f32.gmra.mrb[0].mxu0 %v771
        %v1075 = vpop.f32.mrb[0].mxu0
        %v1076 = vadd.f32 %v915, %v1075
        %v1077 = vpop.f32.mrb[0].mxu0
        %v1078 = vadd.f32 %v917, %v1077
        %1079 = vmatprep.mubr.f32.mxu0 0.0
        %1080 = vmatmul.mubr.f32.gmra.mrb[0].mxu0 %v774
        %v1081 = vpop.f32.mrb[0].mxu0
        %v1082 = vadd.f32 %v921, %v1081
        %v1083 = vpop.f32.mrb[0].mxu0
        %v1084 = vadd.f32 %v923, %v1083
        %1085 = vmatprep.mubr.f32.mxu0 0.0
        %1086 = vmatmul.mubr.f32.gmra.mrb[0].mxu0 %v777
        %v1087 = vpop.f32.mrb[0].mxu0
        %v1088 = vadd.f32 %v927, %v1087
        %v1089 = vpop.f32.mrb[0].mxu0
        %v1090 = vadd.f32 %v929, %v1089
        %1091 = vmatprep.mubr.f32.mxu0 0.0
        %1092 = vmatmul.mubr.f32.gmra.mrb[0].mxu0 %v780
        %v1093 = vpop.f32.mrb[0].mxu0
        %v1094 = vadd.f32 %v933, %v1093
        %v1095 = vpop.f32.mrb[0].mxu0
        %v1096 = vadd.f32 %v935, %v1095
        %1097 = vmatprep.mubr.f32.mxu0 0.0
        %1098 = vmatmul.mubr.f32.gmra.mrb[0].mxu0 %v783
        %v1099 = vpop.f32.mrb[0].mxu0
        %v1100 = vadd.f32 %v939, %v1099
        %v1101 = vpop.f32.mrb[0].mxu0
        %v1102 = vadd.f32 %v941, %v1101
        %1103 = vmatprep.mubr.f32.mxu0 0.0
        %1104 = vmatmul.mubr.f32.gmra.mrb[0].mxu0 %v786
        %v1105 = vpop.f32.mrb[0].mxu0
        %v1106 = vadd.f32 %v945, %v1105
        %v1107 = vpop.f32.mrb[0].mxu0
        %v1108 = vadd.f32 %v947, %v1107
        %1109 = vdwg.mxu0
        %v1110 = vld [vmem:[%s4] sm:$0x3]
        %v1112 = vlaneseq
        %v1113 = vshrl.u32 %v1112, 7
        %v1114 = vsub.s32 0, %v1113
        %v1115 = vrot.slane %v1110, %v1114
        %v1116 = vlaneseq
        %v1117 = vshrl.u32 %v1116, 7
        %v1118 = vsub.s32 1, %v1117
        %v1119 = vrot.slane %v1110, %v1118
        %v1122 = vadd.f32 %v1016, %v1115
        %v1123 = vadd.f32 %v1018, %v1119
        %v1124 = vadd.f32 %v1022, %v1115
        %v1125 = vadd.f32 %v1024, %v1119
        %v1126 = vadd.f32 %v1028, %v1115
        %v1127 = vadd.f32 %v1030, %v1119
        %v1128 = vadd.f32 %v1034, %v1115
        %v1129 = vadd.f32 %v1036, %v1119
        %v1130 = vadd.f32 %v1040, %v1115
        %v1131 = vadd.f32 %v1042, %v1119
        %v1132 = vadd.f32 %v1046, %v1115
        %v1133 = vadd.f32 %v1048, %v1119
        %v1134 = vadd.f32 %v1052, %v1115
        %v1135 = vadd.f32 %v1054, %v1119
        %v1136 = vadd.f32 %v1058, %v1115
        %v1137 = vadd.f32 %v1060, %v1119
        %v1138 = vadd.f32 %v1064, %v1115
        %v1139 = vadd.f32 %v1066, %v1119
        %v1140 = vadd.f32 %v1070, %v1115
        %v1141 = vadd.f32 %v1072, %v1119
        %v1142 = vadd.f32 %v1076, %v1115
        %v1143 = vadd.f32 %v1078, %v1119
        %v1144 = vadd.f32 %v1082, %v1115
        %v1145 = vadd.f32 %v1084, %v1119
        %v1146 = vadd.f32 %v1088, %v1115
        %v1147 = vadd.f32 %v1090, %v1119
        %v1148 = vadd.f32 %v1094, %v1115
        %v1149 = vadd.f32 %v1096, %v1119
        %v1150 = vadd.f32 %v1100, %v1115
        %v1151 = vadd.f32 %v1102, %v1119
        %v1152 = vadd.f32 %v1106, %v1115
        %v1153 = vadd.f32 %v1108, %v1119
        %v1154 = vmax.f32 %v1122, 0.0
        %v1155 = vmax.f32 %v1123, 0.0
        %v1156 = vmax.f32 %v1124, 0.0
        %v1157 = vmax.f32 %v1125, 0.0
        %v1158 = vmax.f32 %v1126, 0.0
        %v1159 = vmax.f32 %v1127, 0.0
        %v1160 = vmax.f32 %v1128, 0.0
        %v1161 = vmax.f32 %v1129, 0.0
        %v1162 = vmax.f32 %v1130, 0.0
        %v1163 = vmax.f32 %v1131, 0.0
        %v1164 = vmax.f32 %v1132, 0.0
        %v1165 = vmax.f32 %v1133, 0.0
        %v1166 = vmax.f32 %v1134, 0.0
        %v1167 = vmax.f32 %v1135, 0.0
        %v1168 = vmax.f32 %v1136, 0.0
        %v1169 = vmax.f32 %v1137, 0.0
        %v1170 = vmax.f32 %v1138, 0.0
        %v1171 = vmax.f32 %v1139, 0.0
        %v1172 = vmax.f32 %v1140, 0.0
        %v1173 = vmax.f32 %v1141, 0.0
        %v1174 = vmax.f32 %v1142, 0.0
        %v1175 = vmax.f32 %v1143, 0.0
        %v1176 = vmax.f32 %v1144, 0.0
        %v1177 = vmax.f32 %v1145, 0.0
        %v1178 = vmax.f32 %v1146, 0.0
        %v1179 = vmax.f32 %v1147, 0.0
        %v1180 = vmax.f32 %v1148, 0.0
        %v1181 = vmax.f32 %v1149, 0.0
        %v1182 = vmax.f32 %v1150, 0.0
        %v1183 = vmax.f32 %v1151, 0.0
        %v1184 = vmax.f32 %v1152, 0.0
        %v1185 = vmax.f32 %v1153, 0.0
        %v1186 = vld [vmem:[%s5] sm:$0xff]
        %v1187 = vld [vmem:[%s5 + $0x8] sm:$0xff]
        %v1188 = vld [vmem:[%s5 + $0x10] sm:$0xff]
        %v1189 = vld [vmem:[%s5 + $0x18] sm:$0xff]
        %v1190 = vld [vmem:[%s5 + $0x20] sm:$0xff]
        %v1191 = vld [vmem:[%s5 + $0x28] sm:$0xff]
        %v1192 = vld [vmem:[%s5 + $0x30] sm:$0xff]
        %v1193 = vld [vmem:[%s5 + $0x38] sm:$0xff]
        %v1194 = vld [vmem:[%s5 + $0x40] sm:$0xff]
        %v1195 = vld [vmem:[%s5 + $0x48] sm:$0xff]
        %v1196 = vld [vmem:[%s5 + $0x50] sm:$0xff]
        %v1197 = vld [vmem:[%s5 + $0x58] sm:$0xff]
        %v1198 = vld [vmem:[%s5 + $0x60] sm:$0xff]
        %v1199 = vld [vmem:[%s5 + $0x68] sm:$0xff]
        %v1200 = vld [vmem:[%s5 + $0x70] sm:$0xff]
        %v1201 = vld [vmem:[%s5 + $0x78] sm:$0xff]
        %v1202 = vld [vmem:[%s5 + $0x80] sm:$0xff]
        %v1203 = vld [vmem:[%s5 + $0x88] sm:$0xff]
        %v1204 = vld [vmem:[%s5 + $0x90] sm:$0xff]
        %v1205 = vld [vmem:[%s5 + $0x98] sm:$0xff]
        %v1206 = vld [vmem:[%s5 + $0xa0] sm:$0xff]
        %v1207 = vld [vmem:[%s5 + $0xa8] sm:$0xff]
        %v1208 = vld [vmem:[%s5 + $0xb0] sm:$0xff]
        %v1209 = vld [vmem:[%s5 + $0xb8] sm:$0xff]
        %v1210 = vld [vmem:[%s5 + $0xc0] sm:$0xff]
        %v1211 = vld [vmem:[%s5 + $0xc8] sm:$0xff]
        %v1212 = vld [vmem:[%s5 + $0xd0] sm:$0xff]
        %v1213 = vld [vmem:[%s5 + $0xd8] sm:$0xff]
        %v1214 = vld [vmem:[%s5 + $0xe0] sm:$0xff]
        %v1215 = vld [vmem:[%s5 + $0xe8] sm:$0xff]
        %v1216 = vld [vmem:[%s5 + $0xf0] sm:$0xff]
        %v1217 = vld [vmem:[%s5 + $0xf8] sm:$0xff]
        %v1218 = vld [vmem:[%s5 + $0x100] sm:$0xff]
        %v1219 = vld [vmem:[%s5 + $0x108] sm:$0xff]
        %v1220 = vld [vmem:[%s5 + $0x110] sm:$0xff]
        %v1221 = vld [vmem:[%s5 + $0x118] sm:$0xff]
        %v1222 = vld [vmem:[%s5 + $0x120] sm:$0xff]
        %v1223 = vld [vmem:[%s5 + $0x128] sm:$0xff]
        %v1224 = vld [vmem:[%s5 + $0x130] sm:$0xff]
        %v1225 = vld [vmem:[%s5 + $0x138] sm:$0xff]
        %v1226 = vld [vmem:[%s5 + $0x140] sm:$0xff]
        %v1227 = vld [vmem:[%s5 + $0x148] sm:$0xff]
        %v1228 = vld [vmem:[%s5 + $0x150] sm:$0xff]
        %v1229 = vld [vmem:[%s5 + $0x158] sm:$0xff]
        %v1230 = vld [vmem:[%s5 + $0x160] sm:$0xff]
        %v1231 = vld [vmem:[%s5 + $0x168] sm:$0xff]
        %v1232 = vld [vmem:[%s5 + $0x170] sm:$0xff]
        %v1233 = vld [vmem:[%s5 + $0x178] sm:$0xff]
        %v1234 = vld [vmem:[%s5 + $0x180] sm:$0xff]
        %v1235 = vld [vmem:[%s5 + $0x188] sm:$0xff]
        %v1236 = vld [vmem:[%s5 + $0x190] sm:$0xff]
        %v1237 = vld [vmem:[%s5 + $0x198] sm:$0xff]
        %v1238 = vld [vmem:[%s5 + $0x1a0] sm:$0xff]
        %v1239 = vld [vmem:[%s5 + $0x1a8] sm:$0xff]
        %v1240 = vld [vmem:[%s5 + $0x1b0] sm:$0xff]
        %v1241 = vld [vmem:[%s5 + $0x1b8] sm:$0xff]
        %v1242 = vld [vmem:[%s5 + $0x1c0] sm:$0xff]
        %v1243 = vld [vmem:[%s5 + $0x1c8] sm:$0xff]
        %v1244 = vld [vmem:[%s5 + $0x1d0] sm:$0xff]
        %v1245 = vld [vmem:[%s5 + $0x1d8] sm:$0xff]
        %v1246 = vld [vmem:[%s5 + $0x1e0] sm:$0xff]
        %v1247 = vld [vmem:[%s5 + $0x1e8] sm:$0xff]
        %v1248 = vld [vmem:[%s5 + $0x1f0] sm:$0xff]
        %v1249 = vld [vmem:[%s5 + $0x1f8] sm:$0xff]
        %v1250 = vld [vmem:[%s6] sm:$0x3]
        %v1252 = vlaneseq
        %v1253 = vshrl.u32 %v1252, 7
        %v1254 = vsub.s32 0, %v1253
        %v1255 = vrot.slane %v1250, %v1254
        %v1256 = vlaneseq
        %v1257 = vshrl.u32 %v1256, 7
        %v1258 = vsub.s32 1, %v1257
        %v1259 = vrot.slane %v1250, %v1258
        %1262 = vmatprep.subr.mxu0 %v1187
        %1263 = vmatpush1.msra.mxu0 %v1186
        %1264 = vmatprep.subr.mxu0 %v1189
        %1265 = vmatpush1.msra.mxu0 %v1188
        %1266 = vmatprep.subr.mxu0 %v1191
        %1267 = vmatpush1.msra.mxu0 %v1190
        %1268 = vmatprep.subr.mxu0 %v1193
        %1269 = vmatpush1.msra.mxu0 %v1192
        %1270 = vmatprep.subr.mxu0 %v1195
        %1271 = vmatpush1.msra.mxu0 %v1194
        %1272 = vmatprep.subr.mxu0 %v1197
        %1273 = vmatpush1.msra.mxu0 %v1196
        %1274 = vmatprep.subr.mxu0 %v1199
        %1275 = vmatpush1.msra.mxu0 %v1198
        %1276 = vmatprep.subr.mxu0 %v1201
        %1277 = vmatpush1.msra.mxu0 %v1200
        %1278 = vmatprep.subr.mxu0 %v1203
        %1279 = vmatpush1.msra.mxu0 %v1202
        %1280 = vmatprep.subr.mxu0 %v1205
        %1281 = vmatpush1.msra.mxu0 %v1204
        %1282 = vmatprep.subr.mxu0 %v1207
        %1283 = vmatpush1.msra.mxu0 %v1206
        %1284 = vmatprep.subr.mxu0 %v1209
        %1285 = vmatpush1.msra.mxu0 %v1208
        %1286 = vmatprep.subr.mxu0 %v1211
        %1287 = vmatpush1.msra.mxu0 %v1210
        %1288 = vmatprep.subr.mxu0 %v1213
        %1289 = vmatpush1.msra.mxu0 %v1212
        %1290 = vmatprep.subr.mxu0 %v1215
        %1291 = vmatpush1.msra.mxu0 %v1214
        %1292 = vmatprep.subr.mxu0 %v1217
        %1293 = vmatpush1.msra.mxu0 %v1216
        %1294 = vmatprep.subr.mxu0 %v1219
        %1295 = vmatpush1.msra.mxu0 %v1218
        %1296 = vmatprep.subr.mxu0 %v1221
        %1297 = vmatpush1.msra.mxu0 %v1220
        %1298 = vmatprep.subr.mxu0 %v1223
        %1299 = vmatpush1.msra.mxu0 %v1222
        %1300 = vmatprep.subr.mxu0 %v1225
        %1301 = vmatpush1.msra.mxu0 %v1224
        %1302 = vmatprep.subr.mxu0 %v1227
        %1303 = vmatpush1.msra.mxu0 %v1226
        %1304 = vmatprep.subr.mxu0 %v1229
        %1305 = vmatpush1.msra.mxu0 %v1228
        %1306 = vmatprep.subr.mxu0 %v1231
        %1307 = vmatpush1.msra.mxu0 %v1230
        %1308 = vmatprep.subr.mxu0 %v1233
        %1309 = vmatpush1.msra.mxu0 %v1232
        %1310 = vmatprep.subr.mxu0 %v1235
        %1311 = vmatpush1.msra.mxu0 %v1234
        %1312 = vmatprep.subr.mxu0 %v1237
        %1313 = vmatpush1.msra.mxu0 %v1236
        %1314 = vmatprep.subr.mxu0 %v1239
        %1315 = vmatpush1.msra.mxu0 %v1238
        %1316 = vmatprep.subr.mxu0 %v1241
        %1317 = vmatpush1.msra.mxu0 %v1240
        %1318 = vmatprep.subr.mxu0 %v1243
        %1319 = vmatpush1.msra.mxu0 %v1242
        %1320 = vmatprep.subr.mxu0 %v1245
        %1321 = vmatpush1.msra.mxu0 %v1244
        %1322 = vmatprep.subr.mxu0 %v1247
        %1323 = vmatpush1.msra.mxu0 %v1246
        %1324 = vmatprep.subr.mxu0 %v1249
        %1325 = vmatpush1.msra.mxu0 %v1248
        %1326 = vmatprep.mubr.f32.mxu0 %v1155
        %1327 = vmatmul.mubr.f32.gmra.mrb[0].mxu0 %v1154
        %v1328 = vpop.f32.mrb[0].mxu0
        %v1329 = vadd.f32 %v1255, %v1328
        %v1330 = vpop.f32.mrb[0].mxu0
        %v1331 = vadd.f32 %v1259, %v1330
        %1332 = vmatprep.mubr.f32.mxu0 %v1157
        %1333 = vmatmul.mubr.f32.gmra.mrb[0].mxu0 %v1156
        %v1334 = vpop.f32.mrb[0].mxu0
        %v1335 = vadd.f32 %v1255, %v1334
        %v1336 = vpop.f32.mrb[0].mxu0
        %v1337 = vadd.f32 %v1259, %v1336
        %1338 = vmatprep.mubr.f32.mxu0 %v1159
        %1339 = vmatmul.mubr.f32.gmra.mrb[0].mxu0 %v1158
        %v1340 = vpop.f32.mrb[0].mxu0
        %v1341 = vadd.f32 %v1255, %v1340
        %v1342 = vpop.f32.mrb[0].mxu0
        %v1343 = vadd.f32 %v1259, %v1342
        %1344 = vmatprep.mubr.f32.mxu0 %v1161
        %1345 = vmatmul.mubr.f32.gmra.mrb[0].mxu0 %v1160
        %v1346 = vpop.f32.mrb[0].mxu0
        %v1347 = vadd.f32 %v1255, %v1346
        %v1348 = vpop.f32.mrb[0].mxu0
        %v1349 = vadd.f32 %v1259, %v1348
        %1350 = vmatprep.mubr.f32.mxu0 %v1163
        %1351 = vmatmul.mubr.f32.gmra.mrb[0].mxu0 %v1162
        %v1352 = vpop.f32.mrb[0].mxu0
        %v1353 = vadd.f32 %v1255, %v1352
        %v1354 = vpop.f32.mrb[0].mxu0
        %v1355 = vadd.f32 %v1259, %v1354
        %1356 = vmatprep.mubr.f32.mxu0 %v1165
        %1357 = vmatmul.mubr.f32.gmra.mrb[0].mxu0 %v1164
        %v1358 = vpop.f32.mrb[0].mxu0
        %v1359 = vadd.f32 %v1255, %v1358
        %v1360 = vpop.f32.mrb[0].mxu0
        %v1361 = vadd.f32 %v1259, %v1360
        %1362 = vmatprep.mubr.f32.mxu0 %v1167
        %1363 = vmatmul.mubr.f32.gmra.mrb[0].mxu0 %v1166
        %v1364 = vpop.f32.mrb[0].mxu0
        %v1365 = vadd.f32 %v1255, %v1364
        %v1366 = vpop.f32.mrb[0].mxu0
        %v1367 = vadd.f32 %v1259, %v1366
        %1368 = vmatprep.mubr.f32.mxu0 %v1169
        %1369 = vmatmul.mubr.f32.gmra.mrb[0].mxu0 %v1168
        %v1370 = vpop.f32.mrb[0].mxu0
        %v1371 = vadd.f32 %v1255, %v1370
        %v1372 = vpop.f32.mrb[0].mxu0
        %v1373 = vadd.f32 %v1259, %v1372
        %1374 = vmatprep.mubr.f32.mxu0 %v1171
        %1375 = vmatmul.mubr.f32.gmra.mrb[0].mxu0 %v1170
        %v1376 = vpop.f32.mrb[0].mxu0
        %v1377 = vadd.f32 %v1255, %v1376
        %v1378 = vpop.f32.mrb[0].mxu0
        %v1379 = vadd.f32 %v1259, %v1378
        %1380 = vmatprep.mubr.f32.mxu0 %v1173
        %1381 = vmatmul.mubr.f32.gmra.mrb[0].mxu0 %v1172
        %v1382 = vpop.f32.mrb[0].mxu0
        %v1383 = vadd.f32 %v1255, %v1382
        %v1384 = vpop.f32.mrb[0].mxu0
        %v1385 = vadd.f32 %v1259, %v1384
        %1386 = vmatprep.mubr.f32.mxu0 %v1175
        %1387 = vmatmul.mubr.f32.gmra.mrb[0].mxu0 %v1174
        %v1388 = vpop.f32.mrb[0].mxu0
        %v1389 = vadd.f32 %v1255, %v1388
        %v1390 = vpop.f32.mrb[0].mxu0
        %v1391 = vadd.f32 %v1259, %v1390
        %1392 = vmatprep.mubr.f32.mxu0 %v1177
        %1393 = vmatmul.mubr.f32.gmra.mrb[0].mxu0 %v1176
        %v1394 = vpop.f32.mrb[0].mxu0
        %v1395 = vadd.f32 %v1255, %v1394
        %v1396 = vpop.f32.mrb[0].mxu0
        %v1397 = vadd.f32 %v1259, %v1396
        %1398 = vmatprep.mubr.f32.mxu0 %v1179
        %1399 = vmatmul.mubr.f32.gmra.mrb[0].mxu0 %v1178
        %v1400 = vpop.f32.mrb[0].mxu0
        %v1401 = vadd.f32 %v1255, %v1400
        %v1402 = vpop.f32.mrb[0].mxu0
        %v1403 = vadd.f32 %v1259, %v1402
        %1404 = vmatprep.mubr.f32.mxu0 %v1181
        %1405 = vmatmul.mubr.f32.gmra.mrb[0].mxu0 %v1180
        %v1406 = vpop.f32.mrb[0].mxu0
        %v1407 = vadd.f32 %v1255, %v1406
        %v1408 = vpop.f32.mrb[0].mxu0
        %v1409 = vadd.f32 %v1259, %v1408
        %1410 = vmatprep.mubr.f32.mxu0 %v1183
        %1411 = vmatmul.mubr.f32.gmra.mrb[0].mxu0 %v1182
        %v1412 = vpop.f32.mrb[0].mxu0
        %v1413 = vadd.f32 %v1255, %v1412
        %v1414 = vpop.f32.mrb[0].mxu0
        %v1415 = vadd.f32 %v1259, %v1414
        %1416 = vmatprep.mubr.f32.mxu0 %v1185
        %1417 = vmatmul.mubr.f32.gmra.mrb[0].mxu0 %v1184
        %v1418 = vpop.f32.mrb[0].mxu0
        %v1419 = vadd.f32 %v1255, %v1418
        %v1420 = vpop.f32.mrb[0].mxu0
        %v1421 = vadd.f32 %v1259, %v1420
        %1422 = vdwg.mxu0
        %v1423 = vmax.f32 %v1329, 0.0
        %v1424 = vmax.f32 %v1331, 0.0
        %v1425 = vmax.f32 %v1335, 0.0
        %v1426 = vmax.f32 %v1337, 0.0
        %v1427 = vmax.f32 %v1341, 0.0
        %v1428 = vmax.f32 %v1343, 0.0
        %v1429 = vmax.f32 %v1347, 0.0
        %v1430 = vmax.f32 %v1349, 0.0
        %v1431 = vmax.f32 %v1353, 0.0
        %v1432 = vmax.f32 %v1355, 0.0
        %v1433 = vmax.f32 %v1359, 0.0
        %v1434 = vmax.f32 %v1361, 0.0
        %v1435 = vmax.f32 %v1365, 0.0
        %v1436 = vmax.f32 %v1367, 0.0
        %v1437 = vmax.f32 %v1371, 0.0
        %v1438 = vmax.f32 %v1373, 0.0
        %v1439 = vmax.f32 %v1377, 0.0
        %v1440 = vmax.f32 %v1379, 0.0
        %v1441 = vmax.f32 %v1383, 0.0
        %v1442 = vmax.f32 %v1385, 0.0
        %v1443 = vmax.f32 %v1389, 0.0
        %v1444 = vmax.f32 %v1391, 0.0
        %v1445 = vmax.f32 %v1395, 0.0
        %v1446 = vmax.f32 %v1397, 0.0
        %v1447 = vmax.f32 %v1401, 0.0
        %v1448 = vmax.f32 %v1403, 0.0
        %v1449 = vmax.f32 %v1407, 0.0
        %v1450 = vmax.f32 %v1409, 0.0
        %v1451 = vmax.f32 %v1413, 0.0
        %v1452 = vmax.f32 %v1415, 0.0
        %v1453 = vmax.f32 %v1419, 0.0
        %v1454 = vmax.f32 %v1421, 0.0
        %v1455 = vld [vmem:[%s7] sm:$0x3]
        %v1457 = vlaneseq
        %v1458 = vshrl.u32 %v1457, 7
        %v1459 = vsub.s32 0, %v1458
        %v1460 = vrot.slane %v1455, %v1459
        %v1461 = vlaneseq
        %v1462 = vshrl.u32 %v1461, 7
        %v1463 = vsub.s32 1, %v1462
        %v1464 = vrot.slane %v1455, %v1463
        %v1467 = vmul.f32 %v1423, %v1460
        %v1468 = vmul.f32 %v1424, %v1464
        %v1469 = vmul.f32 %v1425, %v1460
        %v1470 = vmul.f32 %v1426, %v1464
        %v1471 = vmul.f32 %v1427, %v1460
        %v1472 = vmul.f32 %v1428, %v1464
        %v1473 = vmul.f32 %v1429, %v1460
        %v1474 = vmul.f32 %v1430, %v1464
        %v1475 = vmul.f32 %v1431, %v1460
        %v1476 = vmul.f32 %v1432, %v1464
        %v1477 = vmul.f32 %v1433, %v1460
        %v1478 = vmul.f32 %v1434, %v1464
        %v1479 = vmul.f32 %v1435, %v1460
        %v1480 = vmul.f32 %v1436, %v1464
        %v1481 = vmul.f32 %v1437, %v1460
        %v1482 = vmul.f32 %v1438, %v1464
        %v1483 = vmul.f32 %v1439, %v1460
        %v1484 = vmul.f32 %v1440, %v1464
        %v1485 = vmul.f32 %v1441, %v1460
        %v1486 = vmul.f32 %v1442, %v1464
        %v1487 = vmul.f32 %v1443, %v1460
        %v1488 = vmul.f32 %v1444, %v1464
        %v1489 = vmul.f32 %v1445, %v1460
        %v1490 = vmul.f32 %v1446, %v1464
        %v1491 = vmul.f32 %v1447, %v1460
        %v1492 = vmul.f32 %v1448, %v1464
        %v1493 = vmul.f32 %v1449, %v1460
        %v1494 = vmul.f32 %v1450, %v1464
        %v1495 = vmul.f32 %v1451, %v1460
        %v1496 = vmul.f32 %v1452, %v1464
        %v1497 = vmul.f32 %v1453, %v1460
        %v1498 = vmul.f32 %v1454, %v1464
        %v1499 = vadd.f32 %v1467, %v1468
        %1500 = vadd.xlane.f32.xlu0 %v1499
        %v1501 = vpop.xlane.xlu0 %1500
        %v1502 = vadd.f32 %v1469, %v1470
        %1503 = vadd.xlane.f32.xlu0 %v1502
        %v1504 = vpop.xlane.xlu0 %1503
        %v1505 = vadd.f32 %v1471, %v1472
        %1506 = vadd.xlane.f32.xlu0 %v1505
        %v1507 = vpop.xlane.xlu0 %1506
        %v1508 = vadd.f32 %v1473, %v1474
        %1509 = vadd.xlane.f32.xlu0 %v1508
        %v1510 = vpop.xlane.xlu0 %1509
        %v1511 = vadd.f32 %v1475, %v1476
        %1512 = vadd.xlane.f32.xlu0 %v1511
        %v1513 = vpop.xlane.xlu0 %1512
        %v1514 = vadd.f32 %v1477, %v1478
        %1515 = vadd.xlane.f32.xlu0 %v1514
        %v1516 = vpop.xlane.xlu0 %1515
        %v1517 = vadd.f32 %v1479, %v1480
        %1518 = vadd.xlane.f32.xlu0 %v1517
        %v1519 = vpop.xlane.xlu0 %1518
        %v1520 = vadd.f32 %v1481, %v1482
        %1521 = vadd.xlane.f32.xlu0 %v1520
        %v1522 = vpop.xlane.xlu0 %1521
        %v1523 = vadd.f32 %v1483, %v1484
        %1524 = vadd.xlane.f32.xlu0 %v1523
        %v1525 = vpop.xlane.xlu0 %1524
        %v1526 = vadd.f32 %v1485, %v1486
        %1527 = vadd.xlane.f32.xlu0 %v1526
        %v1528 = vpop.xlane.xlu0 %1527
        %v1529 = vadd.f32 %v1487, %v1488
        %1530 = vadd.xlane.f32.xlu0 %v1529
        %v1531 = vpop.xlane.xlu0 %1530
        %v1532 = vadd.f32 %v1489, %v1490
        %1533 = vadd.xlane.f32.xlu0 %v1532
        %v1534 = vpop.xlane.xlu0 %1533
        %v1535 = vadd.f32 %v1491, %v1492
        %1536 = vadd.xlane.f32.xlu0 %v1535
        %v1537 = vpop.xlane.xlu0 %1536
        %v1538 = vadd.f32 %v1493, %v1494
        %1539 = vadd.xlane.f32.xlu0 %v1538
        %v1540 = vpop.xlane.xlu0 %1539
        %v1541 = vadd.f32 %v1495, %v1496
        %1542 = vadd.xlane.f32.xlu0 %v1541
        %v1543 = vpop.xlane.xlu0 %1542
        %v1544 = vadd.f32 %v1497, %v1498
        %1545 = vadd.xlane.f32.xlu0 %v1544
        %v1546 = vpop.xlane.xlu0 %1545
        %s1547 = sld [smem:[#allocation2]]
        %v1548 = vstv %s1547
        %v1549 = vadd.f32 %v1501, %v1548
        %v1550 = vadd.f32 %v1504, %v1548
        %v1551 = vadd.f32 %v1507, %v1548
        %v1552 = vadd.f32 %v1510, %v1548
        %v1553 = vadd.f32 %v1513, %v1548
        %v1554 = vadd.f32 %v1516, %v1548
        %v1555 = vadd.f32 %v1519, %v1548
        %v1556 = vadd.f32 %v1522, %v1548
        %v1557 = vadd.f32 %v1525, %v1548
        %v1558 = vadd.f32 %v1528, %v1548
        %v1559 = vadd.f32 %v1531, %v1548
        %v1560 = vadd.f32 %v1534, %v1548
        %v1561 = vadd.f32 %v1537, %v1548
        %v1562 = vadd.f32 %v1540, %v1548
        %v1563 = vadd.f32 %v1543, %v1548
        %v1564 = vadd.f32 %v1546, %v1548
        %v1581 = vlaneseq
        %v1582 = vand.u32 %v1581, 127
        %v1583 = vlaneseq
        %v1584 = vshrl.u32 %v1583, 7
        %v1585 = vsub.s32 %v1582, %v1584
        %v1586 = vrot.slane %v1549, %v1585
        %v1587 = vadd.s32 %v1582, 4294967288
        %v1588 = vlaneseq
        %v1589 = vshrl.u32 %v1588, 7
        %v1590 = vsub.s32 %v1587, %v1589
        %v1591 = vrot.slane %v1550, %v1590
        %vm1592 = vcmask 130112
        %v1593 = vsel %vm1592, %v1591, %v1586
        %v1594 = vadd.s32 %v1582, 4294967280
        %v1595 = vlaneseq
        %v1596 = vshrl.u32 %v1595, 7
        %v1597 = vsub.s32 %v1594, %v1596
        %v1598 = vrot.slane %v1551, %v1597
        %vm1599 = vcmask 195712
        %v1600 = vsel %vm1599, %v1598, %v1593
        %v1601 = vadd.s32 %v1582, 4294967272
        %v1602 = vlaneseq
        %v1603 = vshrl.u32 %v1602, 7
        %v1604 = vsub.s32 %v1601, %v1603
        %v1605 = vrot.slane %v1552, %v1604
        %vm1606 = vcmask 261312
        %v1607 = vsel %vm1606, %v1605, %v1600
        %v1608 = vadd.s32 %v1582, 4294967264
        %v1609 = vlaneseq
        %v1610 = vshrl.u32 %v1609, 7
        %v1611 = vsub.s32 %v1608, %v1610
        %v1612 = vrot.slane %v1553, %v1611
        %vm1613 = vcmask 326912
        %v1614 = vsel %vm1613, %v1612, %v1607
        %v1615 = vadd.s32 %v1582, 4294967256
        %v1616 = vlaneseq
        %v1617 = vshrl.u32 %v1616, 7
        %v1618 = vsub.s32 %v1615, %v1617
        %v1619 = vrot.slane %v1554, %v1618
        %vm1620 = vcmask 392512
        %v1621 = vsel %vm1620, %v1619, %v1614
        %v1622 = vadd.s32 %v1582, 4294967248
        %v1623 = vlaneseq
        %v1624 = vshrl.u32 %v1623, 7
        %v1625 = vsub.s32 %v1622, %v1624
        %v1626 = vrot.slane %v1555, %v1625
        %vm1627 = vcmask 458112
        %v1628 = vsel %vm1627, %v1626, %v1621
        %v1629 = vadd.s32 %v1582, 4294967240
        %v1630 = vlaneseq
        %v1631 = vshrl.u32 %v1630, 7
        %v1632 = vsub.s32 %v1629, %v1631
        %v1633 = vrot.slane %v1556, %v1632
        %vm1634 = vcmask 523712
        %v1635 = vsel %vm1634, %v1633, %v1628
        %v1636 = vadd.s32 %v1582, 4294967232
        %v1637 = vlaneseq
        %v1638 = vshrl.u32 %v1637, 7
        %v1639 = vsub.s32 %v1636, %v1638
        %v1640 = vrot.slane %v1557, %v1639
        %vm1641 = vcmask 589312
        %v1642 = vsel %vm1641, %v1640, %v1635
        %v1643 = vadd.s32 %v1582, 4294967224
        %v1644 = vlaneseq
        %v1645 = vshrl.u32 %v1644, 7
        %v1646 = vsub.s32 %v1643, %v1645
        %v1647 = vrot.slane %v1558, %v1646
        %vm1648 = vcmask 654912
        %v1649 = vsel %vm1648, %v1647, %v1642
        %v1650 = vadd.s32 %v1582, 4294967216
        %v1651 = vlaneseq
        %v1652 = vshrl.u32 %v1651, 7
        %v1653 = vsub.s32 %v1650, %v1652
        %v1654 = vrot.slane %v1559, %v1653
        %vm1655 = vcmask 720512
        %v1656 = vsel %vm1655, %v1654, %v1649
        %v1657 = vadd.s32 %v1582, 4294967208
        %v1658 = vlaneseq
        %v1659 = vshrl.u32 %v1658, 7
        %v1660 = vsub.s32 %v1657, %v1659
        %v1661 = vrot.slane %v1560, %v1660
        %vm1662 = vcmask 786112
        %v1663 = vsel %vm1662, %v1661, %v1656
        %v1664 = vadd.s32 %v1582, 4294967200
        %v1665 = vlaneseq
        %v1666 = vshrl.u32 %v1665, 7
        %v1667 = vsub.s32 %v1664, %v1666
        %v1668 = vrot.slane %v1561, %v1667
        %vm1669 = vcmask 851712
        %v1670 = vsel %vm1669, %v1668, %v1663
        %v1671 = vadd.s32 %v1582, 4294967192
        %v1672 = vlaneseq
        %v1673 = vshrl.u32 %v1672, 7
        %v1674 = vsub.s32 %v1671, %v1673
        %v1675 = vrot.slane %v1562, %v1674
        %vm1676 = vcmask 917312
        %v1677 = vsel %vm1676, %v1675, %v1670
        %v1678 = vadd.s32 %v1582, 4294967184
        %v1679 = vlaneseq
        %v1680 = vshrl.u32 %v1679, 7
        %v1681 = vsub.s32 %v1678, %v1680
        %v1682 = vrot.slane %v1563, %v1681
        %vm1683 = vcmask 982912
        %v1684 = vsel %vm1683, %v1682, %v1677
        %v1685 = vadd.s32 %v1582, 4294967176
        %v1686 = vlaneseq
        %v1687 = vshrl.u32 %v1686, 7
        %v1688 = vsub.s32 %v1685, %v1687
        %v1689 = vrot.slane %v1564, %v1688
        %vm1690 = vcmask 1048512
        %v1691 = vsel %vm1690, %v1689, %v1684
        %1693 = vst [vmem:[%s344] sm:$0x1] %v1691
        %s1694 = sand.u32 %s231, 1
        %s1695 = scalar_lea.sflag [#allocation4], %s1694
        %s1696 = sand.u32 %s231, 1
        %s1697 = scalar_lea.vmem [#allocation3], %s1696
        // Predicated region
        $region57: #{critic_forward.1} parent=55 // pred_check
          %p1698 = pneg %p241
        $region58: #{critic_forward.1} parent=55 // pred_check_branch
          %1700 = sbr.rel (%p1698) target = $region60
        $region59: #{critic_forward.1} parent=55 // pred_region
          %s1702 = ssub.s32 16, 16
          %1703 = vsyncadd %s1695, %s1702
          %s1704 = smul.addr %s24, 16
          %s1705 = scalar_lea.hbm %s9, %s1704
          %s1707 = sshll.u32 %s1697, 4
          %s1708 = int_to_ptr.vmem [resolvable:$true] %s1707
          %1710 = dma.vmem_to_hbm [thread:$0]  %s1708, 16, %s1705, %s1695
        $region60: #{critic_forward.1} parent=55 // pred_fallthru
          _
      $region56: #{critic_forward.1} parent=5 // pred_fallthru
        _
      %p1711 = scmp.le.s32.totalorder 2, %s19
      // Predicated region
      $region61: #{critic_forward.1} parent=5 // pred_check
        %p1712 = pneg %p1711
      $region62: #{critic_forward.1} parent=5 // pred_check_branch
        %1714 = sbr.rel (%p1712) target = $region64
      $region63: #{critic_forward.1} parent=5 // pred_region
        %s1715 = ssub.s32 %s19, 2
        // Predicated region
        $region65: #{critic_forward.1} parent=63 // pred_check
          %p1716 = pneg %p247
        $region66: #{critic_forward.1} parent=63 // pred_check_branch
          %1718 = sbr.rel (%p1716) target = $region68
        $region67: #{critic_forward.1} parent=63 // pred_region
          %s1719 = sand.u32 %s232, 1
          %s1720 = scalar_lea.sflag [#allocation4], %s1719
          %s1721 = sand.u32 %s232, 1
          %s1722 = scalar_lea.vmem [#allocation3], %s1721
          %1723 = dma.done %s1720, 16
        $region68: #{critic_forward.1} parent=63 // pred_fallthru
          _
      $region64: #{critic_forward.1} parent=5 // pred_fallthru
        _
    $region6: #{critic_forward.1} parent=1 // loop_footer
      %s23 = sadd.s32 1, %s19
    $region7: #{critic_forward.1} parent=1 // loop_footer_branch
      %18 = sbr.rel target = $region3
    $region8: #{critic_forward.1} parent=1 // loop_exit
      _
    %1724 = vsyncpa [#allocation4], 1
    %s1725 = scalar_lea.sflag [#allocation4], 1
    %1726 = vsyncpa %s1725, 1

</llo_original>
